<compile_context>
chip_gen: v7x
topology: tpu7x:2x2x1
jax: 0.10.0
libtpu: 0.0.40
codegen_flags: <defaults>
</compile_context>

<pallas_src>
import jax
import jax.numpy as jnp
from jax.experimental import pallas as pl
from jax.experimental.pallas import tpu as pltpu


# ----------------------------- Pallas kernel --------------------------------
def _mlp_autoencoder_kernel(x_ref,
                            w1_ref, b1_ref,   # encoder layer 1
                            w2_ref, b2_ref,   # encoder layer 2
                            w3_ref, b3_ref,   # decoder layer 1 (folding1)
                            w4_ref, b4_ref,   # decoder layer 2 (output)
                            out_ref, emb_ref, fold1_ref):
    # MXU operands in bf16, accumulation + VPU epilogue (bias, ReLU) in f32.
    x = x_ref[...].astype(jnp.bfloat16)   # no-op when x already arrives bf16

    # encoder
    h1 = jnp.dot(x, w1_ref[...], preferred_element_type=jnp.float32) + b1_ref[...]
    h1 = jnp.maximum(h1, 0.0)                                   # ReLU (VPU, f32)
    emb = jnp.dot(h1.astype(jnp.bfloat16), w2_ref[...],
                  preferred_element_type=jnp.float32) + b2_ref[...]

    # decoder
    f1 = jnp.dot(emb.astype(jnp.bfloat16), w3_ref[...],
                 preferred_element_type=jnp.float32) + b3_ref[...]
    f1 = jnp.maximum(f1, 0.0)                                   # ReLU (VPU, f32)
    out = jnp.dot(f1.astype(jnp.bfloat16), w4_ref[...],
                  preferred_element_type=jnp.float32) + b4_ref[...]

    # One unmasked, lane-dense store per output (feature dims are 128-mult).
    emb_ref[...] = emb.astype(emb_ref.dtype)
    fold1_ref[...] = f1.astype(fold1_ref.dtype)
    out_ref[...] = out.astype(out_ref.dtype)


# --------------------------- tile selection ----------------------------------
def _pick_tile_b(B, tile_b_max=1024, min_tile=128, target_steps=4):
    """Biggest tile <= tile_b_max that still yields >= target_steps grid steps
    (>= 2 per TensorCore under megacore) when the batch allows, never smaller
    than min_tile rows.  Tiles are kept sublane-aligned (multiple of 8)."""
    tile = min(tile_b_max, B)
    tile = -(-tile // 8) * 8
    while tile > min_tile and pl.cdiv(B, tile) < target_steps:
        tile = max(min_tile, tile // 2)
        tile = -(-tile // 8) * 8
    return tile


# ------------------------------- wrapper -------------------------------------
def mlp_autoencoder(x, params, tile_b=1024, out_dtype=jnp.bfloat16):
    """Runs the full autoencoder forward pass as a batch-tiled Pallas call.

    Returns (output, embedding, folding1) — same tuple order as the PyTorch
    module's forward().  x is expected in bf16 (producer contract); outputs
    are emitted in `out_dtype` (bf16 by default) to halve write traffic.
    """
    B, D_in = x.shape
    (w1, b1), (w2, b2), (w3, b3), (w4, b4) = params
    H = w1.shape[1]
    E = w2.shape[1]
    D_out = w4.shape[1]

    # ---- batch tiling (mem-bound kernel: big tiles, but >= 2 steps per TC) ---
    tile_b = _pick_tile_b(B, tile_b_max=tile_b)
    grid_steps = pl.cdiv(B, tile_b)
    grid = (grid_steps,)

    # Pad ragged batches up to a tile multiple; outputs sliced back below.
    B_pad = grid_steps * tile_b
    if B_pad != B:
        x = jnp.pad(x, ((0, B_pad - B), (0, 0)))

    # Only shard the batch axis across TensorCores when each core gets >= 2
    # pipelined steps; otherwise keep it "arbitrary" (single-core pipeline).
    semantics = ("parallel",) if grid_steps >= 4 else ("arbitrary",)

    batch_map = lambda i: (i, 0)   # new batch tile each grid step
    const_map = lambda i: (0, 0)   # weights/biases VMEM-resident, DMA'd once

    def const_spec(shape):
        # Constant index map + single buffer: DMA'd once, half the VMEM.
        return pl.BlockSpec(shape, const_map, pipeline_mode=pl.Buffered(1))

    in_specs = [
        pl.BlockSpec((tile_b, D_in), batch_map),   # x
        const_spec((D_in, H)), const_spec((1, H)),
        const_spec((H, E)),    const_spec((1, E)),
        const_spec((E, H)),    const_spec((1, H)),
        const_spec((H, D_out)), const_spec((1, D_out)),
    ]
    out_specs = (
        pl.BlockSpec((tile_b, D_out), batch_map),  # output
        pl.BlockSpec((tile_b, E), batch_map),      # embedding
        pl.BlockSpec((tile_b, H), batch_map),      # folding1
    )
    out_itemsize = jnp.dtype(out_dtype).itemsize
    out_shapes = (
        jax.ShapeDtypeStruct((B_pad, D_out), out_dtype),
        jax.ShapeDtypeStruct((B_pad, E), out_dtype),
        jax.ShapeDtypeStruct((B_pad, H), out_dtype),
    )

    # ---- VMEM budget (explicit so large tiles don't trip v5e's 16 MiB scoped
    # default; capped at 64 MiB so it also fits v7x physical VMEM) -----------
    weight_bytes = (2 * (D_in * H + H * E + E * H + H * D_out)   # bf16, 1-buf
                    + 4 * (H + E + H + D_out))                   # f32 biases
    per_step_bytes = (
        2 * tile_b * D_in * x.dtype.itemsize                     # x, 2-buf
        + 2 * tile_b * (D_out + E + H) * out_itemsize            # outputs, 2-buf
        + 4 * tile_b * (H + E + H + D_out)                       # f32 intermediates
    )
    vmem_limit = int(min(64 << 20, max(16 << 20, 2 * (weight_bytes + per_step_bytes))))

    flops = 2 * B_pad * (D_in * H + H * E + E * H + H * D_out)
    bytes_accessed = (
        B_pad * D_in * x.dtype.itemsize                          # x read
        + B_pad * (D_out + E + H) * out_itemsize                 # output writes
        + weight_bytes
    )

    out, emb, fold1 = pl.pallas_call(
        _mlp_autoencoder_kernel,
        out_shape=out_shapes,
        grid_spec=pltpu.PrefetchScalarGridSpec(
            num_scalar_prefetch=0,
            grid=grid,
            in_specs=in_specs,
            out_specs=out_specs,
        ),
        compiler_params=pltpu.CompilerParams(
            dimension_semantics=semantics,
            vmem_limit_bytes=vmem_limit,
        ),
        cost_estimate=pl.CostEstimate(
            flops=flops, transcendentals=0, bytes_accessed=bytes_accessed),
    )(x, w1, b1, w2, b2, w3, b3, w4, b4)

    if B_pad != B:
        out, emb, fold1 = out[:B], emb[:B], fold1[:B]
    return out, emb, fold1


# --------------------------- parameter init ----------------------------------
def init_params(key, d_in, hidden, emb):
    """Deterministic init mimicking PyTorch Linear default (uniform ±1/sqrt(fan_in)).

    Weights stored as [in, out] in bf16 (MXU operands); biases as [1, out] f32."""
    dims = [(d_in, hidden), (hidden, emb), (emb, hidden), (hidden, d_in)]
    params = []
    for (fan_in, fan_out) in dims:
        key, kw, kb = jax.random.split(key, 3)
        bound = 1.0 / (fan_in ** 0.5)
        w = jax.random.uniform(kw, (fan_in, fan_out), jnp.float32, -bound, bound)
        b = jax.random.uniform(kb, (1, fan_out), jnp.float32, -bound, bound)
        params.append((w.astype(jnp.bfloat16), b))
    return params


# ------------------------------ reference ------------------------------------
def reference(x, params):
    """Pure-JAX reference mirroring the kernel math (bf16 MXU operands, f32
    accumulation and epilogue); returns f32 activations."""
    (w1, b1), (w2, b2), (w3, b3), (w4, b4) = params
    xb = x.astype(jnp.bfloat16)
    h1 = jnp.maximum(
        jnp.dot(xb, w1, preferred_element_type=jnp.float32) + b1, 0.0)
    emb = jnp.dot(h1.astype(jnp.bfloat16), w2,
                  preferred_element_type=jnp.float32) + b2
    f1 = jnp.maximum(
        jnp.dot(emb.astype(jnp.bfloat16), w3,
                preferred_element_type=jnp.float32) + b3, 0.0)
    out = jnp.dot(f1.astype(jnp.bfloat16), w4,
                  preferred_element_type=jnp.float32) + b4
    return out, emb, f1


if __name__ == "__main__":
    # Small but TPU-aligned shapes: lane-dense feature dims (mult of 128).
    # B=512 with the auto tile picker gives tile_b=128, grid=4 (>= 2 steps per
    # TensorCore on v7x), exercising the pipelined multi-step path.
    B, D_IN, H, E = 512, 256, 128, 128

    key = jax.random.PRNGKey(0)
    key, kx = jax.random.split(key)
    # bf16 input at the call boundary (producer contract) — halves x traffic.
    x = jax.random.normal(kx, (B, D_IN), jnp.float32).astype(jnp.bfloat16)
    params = init_params(key, D_IN, H, E)

    out, emb, fold1 = mlp_autoencoder(x, params)
    jax.block_until_ready((out, emb, fold1))

    ro, re, rf = reference(x, params)
    assert out.shape == (B, D_IN) and emb.shape == (B, E) and fold1.shape == (B, H)
    assert out.dtype == jnp.bfloat16 and emb.dtype == jnp.bfloat16
    # Outputs are bf16 (≈0.4% relative rounding) vs an f32-stored reference.
    assert jnp.allclose(out.astype(jnp.float32), ro, atol=5e-2, rtol=3e-2)
    assert jnp.allclose(emb.astype(jnp.float32), re, atol=5e-2, rtol=3e-2)
    assert jnp.allclose(fold1.astype(jnp.float32), rf, atol=5e-2, rtol=3e-2)

    print("KERNEL_OK")
</pallas_src>

<mosaic_0001>
module attributes {stable_mosaic.version = 11 : i64} {
  func.func @_mlp_autoencoder_kernel(%arg0: i32, %arg1: memref<128x256xbf16, #tpu.memory_space<vmem>>, %arg2: memref<256x128xbf16, #tpu.memory_space<vmem>>, %arg3: memref<1x128xf32, #tpu.memory_space<vmem>>, %arg4: memref<128x128xbf16, #tpu.memory_space<vmem>>, %arg5: memref<1x128xf32, #tpu.memory_space<vmem>>, %arg6: memref<128x128xbf16, #tpu.memory_space<vmem>>, %arg7: memref<1x128xf32, #tpu.memory_space<vmem>>, %arg8: memref<128x256xbf16, #tpu.memory_space<vmem>>, %arg9: memref<1x256xf32, #tpu.memory_space<vmem>>, %arg10: memref<128x256xbf16, #tpu.memory_space<vmem>>, %arg11: memref<128x128xbf16, #tpu.memory_space<vmem>>, %arg12: memref<128x128xbf16, #tpu.memory_space<vmem>>) attributes {dimension_semantics = [#tpu.dimension_semantics<parallel>], iteration_bounds = array<i64: 4>, scalar_prefetch = 0 : i64, scratch_operands = 0 : i64, tpu.core_type = #tpu.core_type<tc>, window_params = [{transform_indices = @transform_0, window_bounds = array<i64: 128, 256>}, {pipeline_mode = #tpu.pipeline_mode<synchronous>, transform_indices = @transform_1, window_bounds = array<i64: 256, 128>}, {pipeline_mode = #tpu.pipeline_mode<synchronous>, transform_indices = @transform_2, window_bounds = array<i64: 1, 128>}, {pipeline_mode = #tpu.pipeline_mode<synchronous>, transform_indices = @transform_3, window_bounds = array<i64: 128, 128>}, {pipeline_mode = #tpu.pipeline_mode<synchronous>, transform_indices = @transform_4, window_bounds = array<i64: 1, 128>}, {pipeline_mode = #tpu.pipeline_mode<synchronous>, transform_indices = @transform_5, window_bounds = array<i64: 128, 128>}, {pipeline_mode = #tpu.pipeline_mode<synchronous>, transform_indices = @transform_6, window_bounds = array<i64: 1, 128>}, {pipeline_mode = #tpu.pipeline_mode<synchronous>, transform_indices = @transform_7, window_bounds = array<i64: 128, 256>}, {pipeline_mode = #tpu.pipeline_mode<synchronous>, transform_indices = @transform_8, window_bounds = array<i64: 1, 256>}, {transform_indices = @transform_9, window_bounds = array<i64: 128, 256>}, {transform_indices = @transform_10, window_bounds = array<i64: 128, 128>}, {transform_indices = @transform_11, window_bounds = array<i64: 128, 128>}]} {
    %c0 = arith.constant 0 : index
    %c0_0 = arith.constant 0 : index
    %0 = vector.load %arg1[%c0, %c0_0] : memref<128x256xbf16, #tpu.memory_space<vmem>>, vector<128x256xbf16>
    %c0_1 = arith.constant 0 : index
    %c0_2 = arith.constant 0 : index
    %1 = vector.load %arg2[%c0_1, %c0_2] : memref<256x128xbf16, #tpu.memory_space<vmem>>, vector<256x128xbf16>
    %cst = arith.constant dense<0.000000e+00> : vector<128x128xf32>
    %2 = tpu.matmul %0, %1, %cst {dimension_numbers = #tpu.dot_dimension_numbers<[1], [0], [0], [1], [0, 0, 1, 1], [], []>} : vector<128x256xbf16>, vector<256x128xbf16>, vector<128x128xf32> -> vector<128x128xf32>
    %c0_3 = arith.constant 0 : index
    %c0_4 = arith.constant 0 : index
    %3 = vector.load %arg3[%c0_3, %c0_4] : memref<1x128xf32, #tpu.memory_space<vmem>>, vector<1x128xf32>
    %4 = vector.broadcast %3 : vector<1x128xf32> to vector<128x128xf32>
    %5 = arith.addf %2, %4 : vector<128x128xf32>
    %cst_5 = arith.constant 0.000000e+00 : f32
    %6 = vector.broadcast %cst_5 : f32 to vector<128x128xf32>
    %7 = arith.maximumf %5, %6 : vector<128x128xf32>
    %8 = arith.truncf %7 : vector<128x128xf32> to vector<128x128xbf16>
    %c0_6 = arith.constant 0 : index
    %c0_7 = arith.constant 0 : index
    %9 = vector.load %arg4[%c0_6, %c0_7] : memref<128x128xbf16, #tpu.memory_space<vmem>>, vector<128x128xbf16>
    %cst_8 = arith.constant dense<0.000000e+00> : vector<128x128xf32>
    %10 = tpu.matmul %8, %9, %cst_8 {dimension_numbers = #tpu.dot_dimension_numbers<[1], [0], [0], [1], [0, 0, 1, 1], [], []>} : vector<128x128xbf16>, vector<128x128xbf16>, vector<128x128xf32> -> vector<128x128xf32>
    %c0_9 = arith.constant 0 : index
    %c0_10 = arith.constant 0 : index
    %11 = vector.load %arg5[%c0_9, %c0_10] : memref<1x128xf32, #tpu.memory_space<vmem>>, vector<1x128xf32>
    %12 = vector.broadcast %11 : vector<1x128xf32> to vector<128x128xf32>
    %13 = arith.addf %10, %12 : vector<128x128xf32>
    %14 = arith.truncf %13 : vector<128x128xf32> to vector<128x128xbf16>
    %c0_11 = arith.constant 0 : index
    %c0_12 = arith.constant 0 : index
    %15 = vector.load %arg6[%c0_11, %c0_12] : memref<128x128xbf16, #tpu.memory_space<vmem>>, vector<128x128xbf16>
    %cst_13 = arith.constant dense<0.000000e+00> : vector<128x128xf32>
    %16 = tpu.matmul %14, %15, %cst_13 {dimension_numbers = #tpu.dot_dimension_numbers<[1], [0], [0], [1], [0, 0, 1, 1], [], []>} : vector<128x128xbf16>, vector<128x128xbf16>, vector<128x128xf32> -> vector<128x128xf32>
    %c0_14 = arith.constant 0 : index
    %c0_15 = arith.constant 0 : index
    %17 = vector.load %arg7[%c0_14, %c0_15] : memref<1x128xf32, #tpu.memory_space<vmem>>, vector<1x128xf32>
    %18 = vector.broadcast %17 : vector<1x128xf32> to vector<128x128xf32>
    %19 = arith.addf %16, %18 : vector<128x128xf32>
    %cst_16 = arith.constant 0.000000e+00 : f32
    %20 = vector.broadcast %cst_16 : f32 to vector<128x128xf32>
    %21 = arith.maximumf %19, %20 : vector<128x128xf32>
    %22 = arith.truncf %21 : vector<128x128xf32> to vector<128x128xbf16>
    %c0_17 = arith.constant 0 : index
    %c0_18 = arith.constant 0 : index
    %23 = vector.load %arg8[%c0_17, %c0_18] : memref<128x256xbf16, #tpu.memory_space<vmem>>, vector<128x256xbf16>
    %cst_19 = arith.constant dense<0.000000e+00> : vector<128x256xf32>
    %24 = tpu.matmul %22, %23, %cst_19 {dimension_numbers = #tpu.dot_dimension_numbers<[1], [0], [0], [1], [0, 0, 1, 1], [], []>} : vector<128x128xbf16>, vector<128x256xbf16>, vector<128x256xf32> -> vector<128x256xf32>
    %c0_20 = arith.constant 0 : index
    %c0_21 = arith.constant 0 : index
    %25 = vector.load %arg9[%c0_20, %c0_21] : memref<1x256xf32, #tpu.memory_space<vmem>>, vector<1x256xf32>
    %26 = vector.broadcast %25 : vector<1x256xf32> to vector<128x256xf32>
    %27 = arith.addf %24, %26 : vector<128x256xf32>
    %28 = arith.truncf %13 : vector<128x128xf32> to vector<128x128xbf16>
    %c0_22 = arith.constant 0 : index
    %c0_23 = arith.constant 0 : index
    %29 = vector.load %arg11[%c0_22, %c0_23] : memref<128x128xbf16, #tpu.memory_space<vmem>>, vector<128x128xbf16>
    tpu.vector_store %arg11[%c0_22, %c0_23], %28 {strides = array<i32>} : memref<128x128xbf16, #tpu.memory_space<vmem>>, vector<128x128xbf16>,
    %30 = arith.truncf %21 : vector<128x128xf32> to vector<128x128xbf16>
    %c0_24 = arith.constant 0 : index
    %c0_25 = arith.constant 0 : index
    %31 = vector.load %arg12[%c0_24, %c0_25] : memref<128x128xbf16, #tpu.memory_space<vmem>>, vector<128x128xbf16>
    tpu.vector_store %arg12[%c0_24, %c0_25], %30 {strides = array<i32>} : memref<128x128xbf16, #tpu.memory_space<vmem>>, vector<128x128xbf16>,
    %32 = arith.truncf %27 : vector<128x256xf32> to vector<128x256xbf16>
    %c0_26 = arith.constant 0 : index
    %c0_27 = arith.constant 0 : index
    %33 = vector.load %arg10[%c0_26, %c0_27] : memref<128x256xbf16, #tpu.memory_space<vmem>>, vector<128x256xbf16>
    tpu.vector_store %arg10[%c0_26, %c0_27], %32 {strides = array<i32>} : memref<128x256xbf16, #tpu.memory_space<vmem>>, vector<128x256xbf16>,
    return
  }
  func.func @transform_0(%arg0: i32) -> (i32, i32) {
    %c0_i32 = arith.constant 0 : i32
    %c0_i32_0 = arith.constant 0 : i32
    return %arg0, %c0_i32 : i32, i32
  }
  func.func @transform_1(%arg0: i32) -> (i32, i32) {
    %c0_i32 = arith.constant 0 : i32
    %c0_i32_0 = arith.constant 0 : i32
    %c0_i32_1 = arith.constant 0 : i32
    return %c0_i32, %c0_i32_0 : i32, i32
  }
  func.func @transform_2(%arg0: i32) -> (i32, i32) {
    %c0_i32 = arith.constant 0 : i32
    %c0_i32_0 = arith.constant 0 : i32
    %c0_i32_1 = arith.constant 0 : i32
    return %c0_i32, %c0_i32_0 : i32, i32
  }
  func.func @transform_3(%arg0: i32) -> (i32, i32) {
    %c0_i32 = arith.constant 0 : i32
    %c0_i32_0 = arith.constant 0 : i32
    %c0_i32_1 = arith.constant 0 : i32
    return %c0_i32, %c0_i32_0 : i32, i32
  }
  func.func @transform_4(%arg0: i32) -> (i32, i32) {
    %c0_i32 = arith.constant 0 : i32
    %c0_i32_0 = arith.constant 0 : i32
    %c0_i32_1 = arith.constant 0 : i32
    return %c0_i32, %c0_i32_0 : i32, i32
  }
  func.func @transform_5(%arg0: i32) -> (i32, i32) {
    %c0_i32 = arith.constant 0 : i32
    %c0_i32_0 = arith.constant 0 : i32
    %c0_i32_1 = arith.constant 0 : i32
    return %c0_i32, %c0_i32_0 : i32, i32
  }
  func.func @transform_6(%arg0: i32) -> (i32, i32) {
    %c0_i32 = arith.constant 0 : i32
    %c0_i32_0 = arith.constant 0 : i32
    %c0_i32_1 = arith.constant 0 : i32
    return %c0_i32, %c0_i32_0 : i32, i32
  }
  func.func @transform_7(%arg0: i32) -> (i32, i32) {
    %c0_i32 = arith.constant 0 : i32
    %c0_i32_0 = arith.constant 0 : i32
    %c0_i32_1 = arith.constant 0 : i32
    return %c0_i32, %c0_i32_0 : i32, i32
  }
  func.func @transform_8(%arg0: i32) -> (i32, i32) {
    %c0_i32 = arith.constant 0 : i32
    %c0_i32_0 = arith.constant 0 : i32
    %c0_i32_1 = arith.constant 0 : i32
    return %c0_i32, %c0_i32_0 : i32, i32
  }
  func.func @transform_9(%arg0: i32) -> (i32, i32) {
    %c0_i32 = arith.constant 0 : i32
    %c0_i32_0 = arith.constant 0 : i32
    return %arg0, %c0_i32 : i32, i32
  }
  func.func @transform_10(%arg0: i32) -> (i32, i32) {
    %c0_i32 = arith.constant 0 : i32
    %c0_i32_0 = arith.constant 0 : i32
    return %arg0, %c0_i32 : i32, i32
  }
  func.func @transform_11(%arg0: i32) -> (i32, i32) {
    %c0_i32 = arith.constant 0 : i32
    %c0_i32_0 = arith.constant 0 : i32
    return %arg0, %c0_i32 : i32, i32
  }
}

</mosaic_0001>

<llo_original>
// kernel: tpu_custom_call.1
$region0: #{tpu_custom_call.1}
  #allocation0 [shape = 'u32[]', space=smem, size = 0x4, offset = 0x4, fixed_abs, tag = 'smem constant byte address 0x4 - core index']
  #allocation1 [shape = 'u32[144,128]{1,0:T(1,128)}', space=vmem, size = 0x12000, scoped, tag = 'internal scratch']
  %s0 = inlined_call_operand.hbm [shape: bf16[512,256], index: 0, kind: input, shape index: {}]
  %s1 = inlined_call_operand.hbm [shape: bf16[256,128], index: 1, kind: input, shape index: {}]
  %s2 = inlined_call_operand.vmem [shape: f32[1,128], index: 2, kind: input, shape index: {}]
  %s3 = inlined_call_operand.hbm [shape: bf16[128,128], index: 3, kind: input, shape index: {}]
  %s4 = inlined_call_operand.vmem [shape: f32[1,128], index: 4, kind: input, shape index: {}]
  %s5 = inlined_call_operand.hbm [shape: bf16[128,128], index: 5, kind: input, shape index: {}]
  %s6 = inlined_call_operand.vmem [shape: f32[1,128], index: 6, kind: input, shape index: {}]
  %s7 = inlined_call_operand.hbm [shape: bf16[128,256], index: 7, kind: input, shape index: {}]
  %s8 = inlined_call_operand.vmem [shape: f32[1,256], index: 8, kind: input, shape index: {}]
  %s9 = inlined_call_operand.hbm [shape: bf16[512,256], index: 9, kind: output, shape index: {0}]
  %s10 = inlined_call_operand.hbm [shape: bf16[512,128], index: 10, kind: output, shape index: {1}]
  %s11 = inlined_call_operand.hbm [shape: bf16[512,128], index: 11, kind: output, shape index: {2}]
  %12 = xla_tuple %s9, %s10, %s11
  %s13 = sld [smem:[#allocation0]]
  $region105: #{tpu_custom_call.1} parent=0
    _
  %s15 = ssub.s32 1, %s13
  %s16 = scalar_select 0, %s15, %s13
  $region1: #{tpu_custom_call.1} parent=0
    #allocation2 [shape = 'u8[131072]{0}', space=vmem, size = 0x20000, scoped, tag = 'input window, operand 0']
    #allocation3 [shape = 's32[2]{0}', space=sflag, size = 0x8, scoped, tag = 'scoped memory for tpu_custom_call.1']
    #allocation4 [shape = 's32[2]{0}', space=sflag, size = 0x8, scoped, tag = 'scoped memory for tpu_custom_call.1']
    #allocation5 [shape = 'u8[65536]{0}', space=vmem, size = 0x10000, scoped, tag = 'input window, operand 1, single buffered']
    #allocation6 [shape = 's32[1]{0}', space=sflag, size = 0x4, scoped, tag = 'scoped memory for tpu_custom_call.1']
    #allocation7 [shape = 'u8[32768]{0}', space=vmem, size = 0x8000, scoped, tag = 'input window, operand 3, single buffered']
    #allocation8 [shape = 'u8[32768]{0}', space=vmem, size = 0x8000, scoped, tag = 'input window, operand 5, single buffered']
    #allocation9 [shape = 's32[1]{0}', space=sflag, size = 0x4, scoped, tag = 'scoped memory for tpu_custom_call.1']
    #allocation10 [shape = 'u8[65536]{0}', space=vmem, size = 0x10000, scoped, tag = 'input window, operand 7, single buffered']
    #allocation11 [shape = 'u8[131072]{0}', space=vmem, size = 0x20000, scoped, tag = 'output window, operand 0']
    #allocation12 [shape = 'u8[65536]{0}', space=vmem, size = 0x10000, scoped, tag = 'output window, operand 1']
    #allocation13 [shape = 's32[2]{0}', space=sflag, size = 0x8, scoped, tag = 'scoped memory for tpu_custom_call.1']
    #allocation14 [shape = 'u8[65536]{0}', space=vmem, size = 0x10000, scoped, tag = 'output window, operand 2']
    %17 = vsyncpa [#allocation3], 0
    %s18 = scalar_lea.sflag [#allocation3], 1
    %19 = vsyncpa %s18, 0
    %20 = vsyncpa [#allocation6], 0
    %21 = vsyncpa [#allocation9], 0
    %22 = vsyncpa [#allocation4], 0
    %s23 = scalar_lea.sflag [#allocation4], 1
    %24 = vsyncpa %s23, 0
    %25 = vsyncpa [#allocation13], 0
    %s26 = scalar_lea.sflag [#allocation13], 1
    %27 = vsyncpa %s26, 0
    loop: start=0, step=1, limit=6
    $region2: #{tpu_custom_call.1} parent=1 // loop_pre_header
      _
    $region3: #{tpu_custom_call.1} parent=1 // loop_header
      %s29 = sphi 0, %s33
      %p30 = scmp.ge.s32.totalorder %s29, 6
      %s39 = sphi 0, %s41
      %s42 = sphi 0, %s39
      %s43 = sphi 0, %s42
      %s59 = sphi 0, %s43
      %s63 = sphi 0, %s63
      %s65 = sphi 0, %s63
      %s66 = sphi 0, %s65
      %s80 = sphi 0, %s66
      %s84 = sphi 0, %s84
      %s86 = sphi 0, %s84
      %s87 = sphi 0, %s86
      %s101 = sphi 0, %s87
      %s105 = sphi 0, %s105
      %s107 = sphi 0, %s105
      %s108 = sphi 0, %s107
      %s122 = sphi 0, %s108
      %s126 = sphi 0, %s126
      %s128 = sphi 0, %s126
      %s129 = sphi 0, %s128
      %s143 = sphi 0, %s129
      %s147 = sphi 0, %s147
      %s149 = sphi 0, %s147
      %s150 = sphi 0, %s149
      %s164 = sphi 0, %s150
      %s168 = sphi 0, %s168
      %s170 = sphi 0, %s168
      %s171 = sphi 0, %s170
      %s185 = sphi 0, %s171
      %s189 = sphi 0, %s189
      %s191 = sphi 0, %s189
      %s192 = sphi 0, %s191
      %s206 = sphi 0, %s192
      %s210 = sphi 0, %s210
      %s212 = sphi 0, %s210
      %s213 = sphi 0, %s212
      %s227 = sphi 0, %s213
      %s233 = sphi 0, %s235
      %s236 = sphi 0, %s233
      %s237 = sphi 0, %s236
      %s253 = sphi 0, %s237
      %s259 = sphi 0, %s261
      %s262 = sphi 0, %s259
      %s263 = sphi 0, %s262
      %s279 = sphi 0, %s263
      %s285 = sphi 0, %s287
      %s288 = sphi 0, %s285
      %s289 = sphi 0, %s288
      %s305 = sphi 0, %s289
    $region4: #{tpu_custom_call.1} parent=1 // loop_header_branch
      %32 = sbr.rel (%p30) target = $region8
    $region5: #{tpu_custom_call.1} parent=1 // loop_body
      %s34 = ssub.s32 %s29, 1
      %s35 = ssub.s32 %s29, 2
      %s36 = sadd.s32 %s29, 1
      %s37 = ssub.s32 %s29, %s36
      %p38 = scmp.eq.s32.totalorder %s37, 0
      %s40 = sadd.s32 %s39, 1
      %s41 = scalar_select %p38, %s39, %s40
      %p44 = pneg %p38
      %p45 = scmp.eq.s32.totalorder %s29, 3
      %p46 = por %p44, %p45
      %p47 = scmp.ne.s32.totalorder %s39, %s42
      %p48 = scmp.eq.s32.totalorder %s29, 0
      %p49 = por %p47, %p48
      %p50 = scmp.ne.s32.totalorder %s39, %s42
      %p51 = scmp.eq.s32.totalorder %s34, 3
      %p52 = por %p50, %p51
      %p53 = scmp.ne.s32.totalorder %s42, %s43
      %p54 = scmp.eq.s32.totalorder %s34, 0
      %p55 = por %p53, %p54
      %p56 = scmp.ne.s32.totalorder %s42, %s43
      %p57 = scmp.eq.s32.totalorder %s35, 3
      %p58 = por %p56, %p57
      %p60 = scmp.ne.s32.totalorder %s43, %s59
      %p61 = scmp.eq.s32.totalorder %s35, 0
      %p62 = por %p60, %p61
      %s64 = sadd.s32 %s63, 1
      %p67 = scmp.eq.s32.totalorder %s29, 3
      %p68 = scmp.ne.s32.totalorder %s63, %s65
      %p69 = scmp.eq.s32.totalorder %s29, 0
      %p70 = por %p68, %p69
      %p71 = scmp.ne.s32.totalorder %s63, %s65
      %p72 = scmp.eq.s32.totalorder %s34, 3
      %p73 = por %p71, %p72
      %p74 = scmp.ne.s32.totalorder %s65, %s66
      %p75 = scmp.eq.s32.totalorder %s34, 0
      %p76 = por %p74, %p75
      %p77 = scmp.ne.s32.totalorder %s65, %s66
      %p78 = scmp.eq.s32.totalorder %s35, 3
      %p79 = por %p77, %p78
      %p81 = scmp.ne.s32.totalorder %s66, %s80
      %p82 = scmp.eq.s32.totalorder %s35, 0
      %p83 = por %p81, %p82
      %s85 = sadd.s32 %s84, 1
      %p88 = scmp.eq.s32.totalorder %s29, 3
      %p89 = scmp.ne.s32.totalorder %s84, %s86
      %p90 = scmp.eq.s32.totalorder %s29, 0
      %p91 = por %p89, %p90
      %p92 = scmp.ne.s32.totalorder %s84, %s86
      %p93 = scmp.eq.s32.totalorder %s34, 3
      %p94 = por %p92, %p93
      %p95 = scmp.ne.s32.totalorder %s86, %s87
      %p96 = scmp.eq.s32.totalorder %s34, 0
      %p97 = por %p95, %p96
      %p98 = scmp.ne.s32.totalorder %s86, %s87
      %p99 = scmp.eq.s32.totalorder %s35, 3
      %p100 = por %p98, %p99
      %p102 = scmp.ne.s32.totalorder %s87, %s101
      %p103 = scmp.eq.s32.totalorder %s35, 0
      %p104 = por %p102, %p103
      %s106 = sadd.s32 %s105, 1
      %p109 = scmp.eq.s32.totalorder %s29, 3
      %p110 = scmp.ne.s32.totalorder %s105, %s107
      %p111 = scmp.eq.s32.totalorder %s29, 0
      %p112 = por %p110, %p111
      %p113 = scmp.ne.s32.totalorder %s105, %s107
      %p114 = scmp.eq.s32.totalorder %s34, 3
      %p115 = por %p113, %p114
      %p116 = scmp.ne.s32.totalorder %s107, %s108
      %p117 = scmp.eq.s32.totalorder %s34, 0
      %p118 = por %p116, %p117
      %p119 = scmp.ne.s32.totalorder %s107, %s108
      %p120 = scmp.eq.s32.totalorder %s35, 3
      %p121 = por %p119, %p120
      %p123 = scmp.ne.s32.totalorder %s108, %s122
      %p124 = scmp.eq.s32.totalorder %s35, 0
      %p125 = por %p123, %p124
      %s127 = sadd.s32 %s126, 1
      %p130 = scmp.eq.s32.totalorder %s29, 3
      %p131 = scmp.ne.s32.totalorder %s126, %s128
      %p132 = scmp.eq.s32.totalorder %s29, 0
      %p133 = por %p131, %p132
      %p134 = scmp.ne.s32.totalorder %s126, %s128
      %p135 = scmp.eq.s32.totalorder %s34, 3
      %p136 = por %p134, %p135
      %p137 = scmp.ne.s32.totalorder %s128, %s129
      %p138 = scmp.eq.s32.totalorder %s34, 0
      %p139 = por %p137, %p138
      %p140 = scmp.ne.s32.totalorder %s128, %s129
      %p141 = scmp.eq.s32.totalorder %s35, 3
      %p142 = por %p140, %p141
      %p144 = scmp.ne.s32.totalorder %s129, %s143
      %p145 = scmp.eq.s32.totalorder %s35, 0
      %p146 = por %p144, %p145
      %s148 = sadd.s32 %s147, 1
      %p151 = scmp.eq.s32.totalorder %s29, 3
      %p152 = scmp.ne.s32.totalorder %s147, %s149
      %p153 = scmp.eq.s32.totalorder %s29, 0
      %p154 = por %p152, %p153
      %p155 = scmp.ne.s32.totalorder %s147, %s149
      %p156 = scmp.eq.s32.totalorder %s34, 3
      %p157 = por %p155, %p156
      %p158 = scmp.ne.s32.totalorder %s149, %s150
      %p159 = scmp.eq.s32.totalorder %s34, 0
      %p160 = por %p158, %p159
      %p161 = scmp.ne.s32.totalorder %s149, %s150
      %p162 = scmp.eq.s32.totalorder %s35, 3
      %p163 = por %p161, %p162
      %p165 = scmp.ne.s32.totalorder %s150, %s164
      %p166 = scmp.eq.s32.totalorder %s35, 0
      %p167 = por %p165, %p166
      %s169 = sadd.s32 %s168, 1
      %p172 = scmp.eq.s32.totalorder %s29, 3
      %p173 = scmp.ne.s32.totalorder %s168, %s170
      %p174 = scmp.eq.s32.totalorder %s29, 0
      %p175 = por %p173, %p174
      %p176 = scmp.ne.s32.totalorder %s168, %s170
      %p177 = scmp.eq.s32.totalorder %s34, 3
      %p178 = por %p176, %p177
      %p179 = scmp.ne.s32.totalorder %s170, %s171
      %p180 = scmp.eq.s32.totalorder %s34, 0
      %p181 = por %p179, %p180
      %p182 = scmp.ne.s32.totalorder %s170, %s171
      %p183 = scmp.eq.s32.totalorder %s35, 3
      %p184 = por %p182, %p183
      %p186 = scmp.ne.s32.totalorder %s171, %s185
      %p187 = scmp.eq.s32.totalorder %s35, 0
      %p188 = por %p186, %p187
      %s190 = sadd.s32 %s189, 1
      %p193 = scmp.eq.s32.totalorder %s29, 3
      %p194 = scmp.ne.s32.totalorder %s189, %s191
      %p195 = scmp.eq.s32.totalorder %s29, 0
      %p196 = por %p194, %p195
      %p197 = scmp.ne.s32.totalorder %s189, %s191
      %p198 = scmp.eq.s32.totalorder %s34, 3
      %p199 = por %p197, %p198
      %p200 = scmp.ne.s32.totalorder %s191, %s192
      %p201 = scmp.eq.s32.totalorder %s34, 0
      %p202 = por %p200, %p201
      %p203 = scmp.ne.s32.totalorder %s191, %s192
      %p204 = scmp.eq.s32.totalorder %s35, 3
      %p205 = por %p203, %p204
      %p207 = scmp.ne.s32.totalorder %s192, %s206
      %p208 = scmp.eq.s32.totalorder %s35, 0
      %p209 = por %p207, %p208
      %s211 = sadd.s32 %s210, 1
      %p214 = scmp.eq.s32.totalorder %s29, 3
      %p215 = scmp.ne.s32.totalorder %s210, %s212
      %p216 = scmp.eq.s32.totalorder %s29, 0
      %p217 = por %p215, %p216
      %p218 = scmp.ne.s32.totalorder %s210, %s212
      %p219 = scmp.eq.s32.totalorder %s34, 3
      %p220 = por %p218, %p219
      %p221 = scmp.ne.s32.totalorder %s212, %s213
      %p222 = scmp.eq.s32.totalorder %s34, 0
      %p223 = por %p221, %p222
      %p224 = scmp.ne.s32.totalorder %s212, %s213
      %p225 = scmp.eq.s32.totalorder %s35, 3
      %p226 = por %p224, %p225
      %p228 = scmp.ne.s32.totalorder %s213, %s227
      %p229 = scmp.eq.s32.totalorder %s35, 0
      %p230 = por %p228, %p229
      %s231 = ssub.s32 %s29, %s36
      %p232 = scmp.eq.s32.totalorder %s231, 0
      %s234 = sadd.s32 %s233, 1
      %s235 = scalar_select %p232, %s233, %s234
      %p238 = pneg %p232
      %p239 = scmp.eq.s32.totalorder %s29, 3
      %p240 = por %p238, %p239
      %p241 = scmp.ne.s32.totalorder %s233, %s236
      %p242 = scmp.eq.s32.totalorder %s29, 0
      %p243 = por %p241, %p242
      %p244 = scmp.ne.s32.totalorder %s233, %s236
      %p245 = scmp.eq.s32.totalorder %s34, 3
      %p246 = por %p244, %p245
      %p247 = scmp.ne.s32.totalorder %s236, %s237
      %p248 = scmp.eq.s32.totalorder %s34, 0
      %p249 = por %p247, %p248
      %p250 = scmp.ne.s32.totalorder %s236, %s237
      %p251 = scmp.eq.s32.totalorder %s35, 3
      %p252 = por %p250, %p251
      %p254 = scmp.ne.s32.totalorder %s237, %s253
      %p255 = scmp.eq.s32.totalorder %s35, 0
      %p256 = por %p254, %p255
      %s257 = ssub.s32 %s29, %s36
      %p258 = scmp.eq.s32.totalorder %s257, 0
      %s260 = sadd.s32 %s259, 1
      %s261 = scalar_select %p258, %s259, %s260
      %p264 = pneg %p258
      %p265 = scmp.eq.s32.totalorder %s29, 3
      %p266 = por %p264, %p265
      %p267 = scmp.ne.s32.totalorder %s259, %s262
      %p268 = scmp.eq.s32.totalorder %s29, 0
      %p269 = por %p267, %p268
      %p270 = scmp.ne.s32.totalorder %s259, %s262
      %p271 = scmp.eq.s32.totalorder %s34, 3
      %p272 = por %p270, %p271
      %p273 = scmp.ne.s32.totalorder %s262, %s263
      %p274 = scmp.eq.s32.totalorder %s34, 0
      %p275 = por %p273, %p274
      %p276 = scmp.ne.s32.totalorder %s262, %s263
      %p277 = scmp.eq.s32.totalorder %s35, 3
      %p278 = por %p276, %p277
      %p280 = scmp.ne.s32.totalorder %s263, %s279
      %p281 = scmp.eq.s32.totalorder %s35, 0
      %p282 = por %p280, %p281
      %s283 = ssub.s32 %s29, %s36
      %p284 = scmp.eq.s32.totalorder %s283, 0
      %s286 = sadd.s32 %s285, 1
      %s287 = scalar_select %p284, %s285, %s286
      %p290 = pneg %p284
      %p291 = scmp.eq.s32.totalorder %s29, 3
      %p292 = por %p290, %p291
      %p293 = scmp.ne.s32.totalorder %s285, %s288
      %p294 = scmp.eq.s32.totalorder %s29, 0
      %p295 = por %p293, %p294
      %p296 = scmp.ne.s32.totalorder %s285, %s288
      %p297 = scmp.eq.s32.totalorder %s34, 3
      %p298 = por %p296, %p297
      %p299 = scmp.ne.s32.totalorder %s288, %s289
      %p300 = scmp.eq.s32.totalorder %s34, 0
      %p301 = por %p299, %p300
      %p302 = scmp.ne.s32.totalorder %s288, %s289
      %p303 = scmp.eq.s32.totalorder %s35, 3
      %p304 = por %p302, %p303
      %p306 = scmp.ne.s32.totalorder %s289, %s305
      %p307 = scmp.eq.s32.totalorder %s35, 0
      %p308 = por %p306, %p307
      %p309 = scmp.le.s32.totalorder 1, %s29
      %p310 = scmp.lt.s32.totalorder %s29, 5
      %p311 = pnand %p309, %p310
      %p312 = pneg %p311
      // Predicated region
      $region9: #{tpu_custom_call.1} parent=5 // pred_check
        _
      $region10: #{tpu_custom_call.1} parent=5 // pred_check_branch
        %314 = sbr.rel (%p311) target = $region12
      $region11: #{tpu_custom_call.1} parent=5 // pred_region
        %s315 = ssub.s32 %s29, 1
        // Predicated region
        $region13: #{tpu_custom_call.1} parent=11 // pred_check
          %p316 = pneg %p76
        $region14: #{tpu_custom_call.1} parent=11 // pred_check_branch
          %318 = sbr.rel (%p316) target = $region16
        $region15: #{tpu_custom_call.1} parent=11 // pred_region
          %s320 = ssub.s32 2048, 2048
          %321 = vsyncadd [#allocation6], %s320
          %s322 = sshll.u32 [#allocation5], 4
          %s323 = int_to_ptr.vmem [resolvable:$true] %s322
          %328 = dma.hbm_to_vmem [thread:$0]  %s1, 2048, %s323, [#allocation6], 64, 64, 4
        $region16: #{tpu_custom_call.1} parent=11 // pred_fallthru
          _
        // Predicated region
        $region17: #{tpu_custom_call.1} parent=11 // pred_check
          %p329 = pneg %p97
        $region18: #{tpu_custom_call.1} parent=11 // pred_check_branch
          %331 = sbr.rel (%p329) target = $region20
        $region19: #{tpu_custom_call.1} parent=11 // pred_region
          _
        $region20: #{tpu_custom_call.1} parent=11 // pred_fallthru
          _
        // Predicated region
        $region21: #{tpu_custom_call.1} parent=11 // pred_check
          %p332 = pneg %p118
        $region22: #{tpu_custom_call.1} parent=11 // pred_check_branch
          %334 = sbr.rel (%p332) target = $region24
        $region23: #{tpu_custom_call.1} parent=11 // pred_region
          %s336 = ssub.s32 1024, 1024
          %337 = vsyncadd [#allocation6], %s336
          %s338 = sshll.u32 [#allocation7], 4
          %s339 = int_to_ptr.vmem [resolvable:$true] %s338
          %344 = dma.hbm_to_vmem [thread:$0]  %s3, 1024, %s339, [#allocation6], 64, 64, 4
        $region24: #{tpu_custom_call.1} parent=11 // pred_fallthru
          _
        // Predicated region
        $region25: #{tpu_custom_call.1} parent=11 // pred_check
          %p345 = pneg %p139
        $region26: #{tpu_custom_call.1} parent=11 // pred_check_branch
          %347 = sbr.rel (%p345) target = $region28
        $region27: #{tpu_custom_call.1} parent=11 // pred_region
          _
        $region28: #{tpu_custom_call.1} parent=11 // pred_fallthru
          _
        // Predicated region
        $region29: #{tpu_custom_call.1} parent=11 // pred_check
          %p348 = pneg %p160
        $region30: #{tpu_custom_call.1} parent=11 // pred_check_branch
          %350 = sbr.rel (%p348) target = $region32
        $region31: #{tpu_custom_call.1} parent=11 // pred_region
          %s352 = ssub.s32 1024, 1024
          %353 = vsyncadd [#allocation9], %s352
          %s354 = sshll.u32 [#allocation8], 4
          %s355 = int_to_ptr.vmem [resolvable:$true] %s354
          %360 = dma.hbm_to_vmem [thread:$0]  %s5, 1024, %s355, [#allocation9], 64, 64, 4
        $region32: #{tpu_custom_call.1} parent=11 // pred_fallthru
          _
        // Predicated region
        $region33: #{tpu_custom_call.1} parent=11 // pred_check
          %p361 = pneg %p181
        $region34: #{tpu_custom_call.1} parent=11 // pred_check_branch
          %363 = sbr.rel (%p361) target = $region36
        $region35: #{tpu_custom_call.1} parent=11 // pred_region
          _
        $region36: #{tpu_custom_call.1} parent=11 // pred_fallthru
          _
        // Predicated region
        $region37: #{tpu_custom_call.1} parent=11 // pred_check
          %p364 = pneg %p202
        $region38: #{tpu_custom_call.1} parent=11 // pred_check_branch
          %366 = sbr.rel (%p364) target = $region40
        $region39: #{tpu_custom_call.1} parent=11 // pred_region
          %s368 = ssub.s32 2048, 2048
          %369 = vsyncadd [#allocation9], %s368
          %s370 = sshll.u32 [#allocation10], 4
          %s371 = int_to_ptr.vmem [resolvable:$true] %s370
          %376 = dma.hbm_to_vmem [thread:$0]  %s7, 2048, %s371, [#allocation9], 128, 128, 8
        $region40: #{tpu_custom_call.1} parent=11 // pred_fallthru
          _
        // Predicated region
        $region41: #{tpu_custom_call.1} parent=11 // pred_check
          %p377 = pneg %p223
        $region42: #{tpu_custom_call.1} parent=11 // pred_check_branch
          %379 = sbr.rel (%p377) target = $region44
        $region43: #{tpu_custom_call.1} parent=11 // pred_region
          _
        $region44: #{tpu_custom_call.1} parent=11 // pred_fallthru
          _
      $region12: #{tpu_custom_call.1} parent=5 // pred_fallthru
        _
      %p380 = scmp.lt.s32.totalorder %s29, 4
      // Predicated region
      $region45: #{tpu_custom_call.1} parent=5 // pred_check
        %p381 = pneg %p380
      $region46: #{tpu_custom_call.1} parent=5 // pred_check_branch
        %383 = sbr.rel (%p381) target = $region48
      $region47: #{tpu_custom_call.1} parent=5 // pred_region
        // Predicated region
        $region49: #{tpu_custom_call.1} parent=47 // pred_check
          %p384 = pneg %p49
        $region50: #{tpu_custom_call.1} parent=47 // pred_check_branch
          %386 = sbr.rel (%p384) target = $region52
        $region51: #{tpu_custom_call.1} parent=47 // pred_region
          %s387 = sand.u32 %s39, 1
          %s388 = scalar_lea.sflag [#allocation3], %s387
          %s389 = sand.u32 %s39, 1
          %s390 = smul.addr %s389, 128
          %s391 = scalar_lea.vmem [#allocation2], %s390
          %s392 = smul.u32 16, %s29
          %s394 = ssub.s32 2048, 2048
          %395 = vsyncadd %s388, %s394
          %s396 = smul.addr %s392, 2
          %s397 = smul.addr %s396, 64
          %s398 = scalar_lea.hbm %s0, %s397
          %s399 = sshll.u32 %s391, 4
          %s400 = int_to_ptr.vmem [resolvable:$true] %s399
          %405 = dma.hbm_to_vmem [thread:$0]  %s398, 2048, %s400, %s388, 128, 128, 8
        $region52: #{tpu_custom_call.1} parent=47 // pred_fallthru
          _
      $region48: #{tpu_custom_call.1} parent=5 // pred_fallthru
        _
      %p406 = scmp.le.s32.totalorder 1, %s29
      %p407 = scmp.lt.s32.totalorder %s29, 5
      %p408 = pnand %p406, %p407
      %p409 = pneg %p408
      // Predicated region
      $region53: #{tpu_custom_call.1} parent=5 // pred_check
        _
      $region54: #{tpu_custom_call.1} parent=5 // pred_check_branch
        %411 = sbr.rel (%p408) target = $region56
      $region55: #{tpu_custom_call.1} parent=5 // pred_region
        %s412 = ssub.s32 %s29, 1
        %s413 = sand.u32 %s42, 1
        %s414 = scalar_lea.sflag [#allocation3], %s413
        %s415 = sand.u32 %s42, 1
        %s416 = smul.addr %s415, 128
        %s417 = scalar_lea.vmem [#allocation2], %s416
        // Predicated region
        $region57: #{tpu_custom_call.1} parent=55 // pred_check
          %p418 = pneg %p55
        $region58: #{tpu_custom_call.1} parent=55 // pred_check_branch
          %420 = sbr.rel (%p418) target = $region60
        $region59: #{tpu_custom_call.1} parent=55 // pred_region
          %421 = dma.done %s414, 2048
        $region60: #{tpu_custom_call.1} parent=55 // pred_fallthru
          _
        // Predicated region
        $region61: #{tpu_custom_call.1} parent=55 // pred_check
          %p422 = pneg %p76
        $region62: #{tpu_custom_call.1} parent=55 // pred_check_branch
          %424 = sbr.rel (%p422) target = $region64
        $region63: #{tpu_custom_call.1} parent=55 // pred_region
          %425 = dma.done [#allocation6], 2048
        $region64: #{tpu_custom_call.1} parent=55 // pred_fallthru
          _
        // Predicated region
        $region65: #{tpu_custom_call.1} parent=55 // pred_check
          %p426 = pneg %p118
        $region66: #{tpu_custom_call.1} parent=55 // pred_check_branch
          %428 = sbr.rel (%p426) target = $region68
        $region67: #{tpu_custom_call.1} parent=55 // pred_region
          %429 = dma.done [#allocation6], 1024
        $region68: #{tpu_custom_call.1} parent=55 // pred_fallthru
          _
        // Predicated region
        $region69: #{tpu_custom_call.1} parent=55 // pred_check
          %p430 = pneg %p160
        $region70: #{tpu_custom_call.1} parent=55 // pred_check_branch
          %432 = sbr.rel (%p430) target = $region72
        $region71: #{tpu_custom_call.1} parent=55 // pred_region
          %433 = dma.done [#allocation9], 1024
        $region72: #{tpu_custom_call.1} parent=55 // pred_fallthru
          _
        // Predicated region
        $region73: #{tpu_custom_call.1} parent=55 // pred_check
          %p434 = pneg %p202
        $region74: #{tpu_custom_call.1} parent=55 // pred_check_branch
          %436 = sbr.rel (%p434) target = $region76
        $region75: #{tpu_custom_call.1} parent=55 // pred_region
          %437 = dma.done [#allocation9], 2048
        $region76: #{tpu_custom_call.1} parent=55 // pred_fallthru
          _
        %s438 = sand.u32 %s42, 1
        %s439 = scalar_lea.sflag [#allocation3], %s438
        %s440 = sand.u32 %s42, 1
        %s441 = smul.addr %s440, 128
        %s442 = scalar_lea.vmem [#allocation2], %s441
        %p443 = pneg %p55
        %p444 = pneg %p52
        %p445 = pneg %p76
        %p446 = pneg %p73
        %p447 = pneg %p97
        %p448 = pneg %p94
        %p449 = pneg %p118
        %p450 = pneg %p115
        %p451 = pneg %p139
        %p452 = pneg %p136
        %p453 = pneg %p160
        %p454 = pneg %p157
        %p455 = pneg %p181
        %p456 = pneg %p178
        %p457 = pneg %p202
        %p458 = pneg %p199
        %p459 = pneg %p223
        %p460 = pneg %p220
        %p461 = pneg %p249
        %p462 = pneg %p246
        %s463 = sand.u32 %s236, 1
        %s464 = scalar_lea.sflag [#allocation4], %s463
        %s465 = sand.u32 %s236, 1
        %s466 = smul.addr %s465, 128
        %s467 = scalar_lea.vmem [#allocation11], %s466
        %p468 = pneg %p275
        %p469 = pneg %p272
        %s470 = sand.u32 %s34, 1
        %s471 = scalar_lea.sflag [#allocation13], %s470
        %s472 = sand.u32 %s262, 1
        %s473 = smul.addr %s472, 64
        %s474 = scalar_lea.vmem [#allocation12], %s473
        %p475 = pneg %p301
        %p476 = pneg %p298
        %s477 = sand.u32 %s34, 1
        %s478 = scalar_lea.sflag [#allocation13], %s477
        %s479 = sand.u32 %s288, 1
        %s480 = smul.addr %s479, 64
        %s481 = scalar_lea.vmem [#allocation14], %s480
        %s482 = smul.u32 16, %s34
        %s483 = smul.u32 16, %s34
        %s484 = smul.u32 16, %s34
        %s485 = smul.u32 16, %s34
        %v487 = vld [vmem:[%s417] sm:$0xff]
        %v488 = vld [vmem:[%s417 + $0x8] sm:$0xff]
        %v489 = vld [vmem:[%s417 + $0x10] sm:$0xff]
        %v490 = vld [vmem:[%s417 + $0x18] sm:$0xff]
        %v491 = vld [vmem:[%s417 + $0x20] sm:$0xff]
        %v492 = vld [vmem:[%s417 + $0x28] sm:$0xff]
        %v493 = vld [vmem:[%s417 + $0x30] sm:$0xff]
        %v494 = vld [vmem:[%s417 + $0x38] sm:$0xff]
        %v495 = vld [vmem:[%s417 + $0x40] sm:$0xff]
        %v496 = vld [vmem:[%s417 + $0x48] sm:$0xff]
        %v497 = vld [vmem:[%s417 + $0x50] sm:$0xff]
        %v498 = vld [vmem:[%s417 + $0x58] sm:$0xff]
        %v499 = vld [vmem:[%s417 + $0x60] sm:$0xff]
        %v500 = vld [vmem:[%s417 + $0x68] sm:$0xff]
        %v501 = vld [vmem:[%s417 + $0x70] sm:$0xff]
        %v502 = vld [vmem:[%s417 + $0x78] sm:$0xff]
        %v503 = vld [vmem:[#allocation5] sm:$0xf]
        %v504 = vld [vmem:[#allocation5 + $0x4] sm:$0xf]
        %v505 = vld [vmem:[#allocation5 + $0x8] sm:$0xf]
        %v506 = vld [vmem:[#allocation5 + $0xc] sm:$0xf]
        %v507 = vld [vmem:[#allocation5 + $0x10] sm:$0xf]
        %v508 = vld [vmem:[#allocation5 + $0x14] sm:$0xf]
        %v509 = vld [vmem:[#allocation5 + $0x18] sm:$0xf]
        %v510 = vld [vmem:[#allocation5 + $0x1c] sm:$0xf]
        %v511 = vld [vmem:[#allocation5 + $0x20] sm:$0xf]
        %v512 = vld [vmem:[#allocation5 + $0x24] sm:$0xf]
        %v513 = vld [vmem:[#allocation5 + $0x28] sm:$0xf]
        %v514 = vld [vmem:[#allocation5 + $0x2c] sm:$0xf]
        %v515 = vld [vmem:[#allocation5 + $0x30] sm:$0xf]
        %v516 = vld [vmem:[#allocation5 + $0x34] sm:$0xf]
        %v517 = vld [vmem:[#allocation5 + $0x38] sm:$0xf]
        %v518 = vld [vmem:[#allocation5 + $0x3c] sm:$0xf]
        %v519 = vld [vmem:[#allocation5 + $0x40] sm:$0xf]
        %v520 = vld [vmem:[#allocation5 + $0x44] sm:$0xf]
        %v521 = vld [vmem:[#allocation5 + $0x48] sm:$0xf]
        %v522 = vld [vmem:[#allocation5 + $0x4c] sm:$0xf]
        %v523 = vld [vmem:[#allocation5 + $0x50] sm:$0xf]
        %v524 = vld [vmem:[#allocation5 + $0x54] sm:$0xf]
        %v525 = vld [vmem:[#allocation5 + $0x58] sm:$0xf]
        %v526 = vld [vmem:[#allocation5 + $0x5c] sm:$0xf]
        %v527 = vld [vmem:[#allocation5 + $0x60] sm:$0xf]
        %v528 = vld [vmem:[#allocation5 + $0x64] sm:$0xf]
        %v529 = vld [vmem:[#allocation5 + $0x68] sm:$0xf]
        %v530 = vld [vmem:[#allocation5 + $0x6c] sm:$0xf]
        %v531 = vld [vmem:[#allocation5 + $0x70] sm:$0xf]
        %v532 = vld [vmem:[#allocation5 + $0x74] sm:$0xf]
        %v533 = vld [vmem:[#allocation5 + $0x78] sm:$0xf]
        %v534 = vld [vmem:[#allocation5 + $0x7c] sm:$0xf]
        %v535 = vld [vmem:[%s2] sm:$0x1]
        %v537 = vlaneseq
        %v538 = vshrl.u32 %v537, 7
        %v539 = vsub.s32 0, %v538
        %v540 = vrot.slane %v535, %v539
        %v558 = vunpack.c.l.b16 %v487
        %v559 = vunpack.c.h.b16 %v487
        %v560 = vunpack.c.l.b16 %v488
        %v561 = vunpack.c.h.b16 %v488
        %v562 = vunpack.c.l.b16 %v489
        %v563 = vunpack.c.h.b16 %v489
        %v564 = vunpack.c.l.b16 %v490
        %v565 = vunpack.c.h.b16 %v490
        %v566 = vunpack.c.l.b16 %v491
        %v567 = vunpack.c.h.b16 %v491
        %v568 = vunpack.c.l.b16 %v492
        %v569 = vunpack.c.h.b16 %v492
        %v570 = vunpack.c.l.b16 %v493
        %v571 = vunpack.c.h.b16 %v493
        %v572 = vunpack.c.l.b16 %v494
        %v573 = vunpack.c.h.b16 %v494
        %v574 = vunpack.c.l.b16 %v495
        %v575 = vunpack.c.h.b16 %v495
        %v576 = vunpack.c.l.b16 %v496
        %v577 = vunpack.c.h.b16 %v496
        %v578 = vunpack.c.l.b16 %v497
        %v579 = vunpack.c.h.b16 %v497
        %v580 = vunpack.c.l.b16 %v498
        %v581 = vunpack.c.h.b16 %v498
        %v582 = vunpack.c.l.b16 %v499
        %v583 = vunpack.c.h.b16 %v499
        %v584 = vunpack.c.l.b16 %v500
        %v585 = vunpack.c.h.b16 %v500
        %v586 = vunpack.c.l.b16 %v501
        %v587 = vunpack.c.h.b16 %v501
        %v588 = vunpack.c.l.b16 %v502
        %v589 = vunpack.c.h.b16 %v502
        %v590 = vpack.c.b16 %v560, %v558
        %v591 = vpack.c.b16 %v561, %v559
        %v592 = vpack.c.b16 %v564, %v562
        %v593 = vpack.c.b16 %v565, %v563
        %v594 = vpack.c.b16 %v568, %v566
        %v595 = vpack.c.b16 %v569, %v567
        %v596 = vpack.c.b16 %v572, %v570
        %v597 = vpack.c.b16 %v573, %v571
        %v598 = vpack.c.b16 %v576, %v574
        %v599 = vpack.c.b16 %v577, %v575
        %v600 = vpack.c.b16 %v580, %v578
        %v601 = vpack.c.b16 %v581, %v579
        %v602 = vpack.c.b16 %v584, %v582
        %v603 = vpack.c.b16 %v585, %v583
        %v604 = vpack.c.b16 %v588, %v586
        %v605 = vpack.c.b16 %v589, %v587
        %v654 = vunpack.c.l.b16 %v503
        %v655 = vunpack.c.l.b16 %v504
        %v656 = vunpack.c.l.b16 %v505
        %v657 = vunpack.c.l.b16 %v506
        %v658 = vunpack.c.l.b16 %v507
        %v659 = vunpack.c.l.b16 %v508
        %v660 = vunpack.c.l.b16 %v509
        %v661 = vunpack.c.l.b16 %v510
        %v662 = vunpack.c.l.b16 %v511
        %v663 = vunpack.c.l.b16 %v512
        %v664 = vunpack.c.l.b16 %v513
        %v665 = vunpack.c.l.b16 %v514
        %v666 = vunpack.c.l.b16 %v515
        %v667 = vunpack.c.l.b16 %v516
        %v668 = vunpack.c.l.b16 %v517
        %v669 = vunpack.c.l.b16 %v518
        %v670 = vunpack.c.l.b16 %v519
        %v671 = vunpack.c.l.b16 %v520
        %v672 = vunpack.c.l.b16 %v521
        %v673 = vunpack.c.l.b16 %v522
        %v674 = vunpack.c.l.b16 %v523
        %v675 = vunpack.c.l.b16 %v524
        %v676 = vunpack.c.l.b16 %v525
        %v677 = vunpack.c.l.b16 %v526
        %v678 = vunpack.c.l.b16 %v527
        %v679 = vunpack.c.l.b16 %v528
        %v680 = vunpack.c.l.b16 %v529
        %v681 = vunpack.c.l.b16 %v530
        %v682 = vunpack.c.l.b16 %v531
        %v683 = vunpack.c.l.b16 %v532
        %v684 = vunpack.c.l.b16 %v533
        %v685 = vunpack.c.l.b16 %v534
        %v686 = vpack.c.b16 %v655, %v654
        %v687 = vpack.c.b16 %v657, %v656
        %v688 = vpack.c.b16 %v659, %v658
        %v689 = vpack.c.b16 %v661, %v660
        %v690 = vpack.c.b16 %v663, %v662
        %v691 = vpack.c.b16 %v665, %v664
        %v692 = vpack.c.b16 %v667, %v666
        %v693 = vpack.c.b16 %v669, %v668
        %v694 = vpack.c.b16 %v671, %v670
        %v695 = vpack.c.b16 %v673, %v672
        %v696 = vpack.c.b16 %v675, %v674
        %v697 = vpack.c.b16 %v677, %v676
        %v698 = vpack.c.b16 %v679, %v678
        %v699 = vpack.c.b16 %v681, %v680
        %v700 = vpack.c.b16 %v683, %v682
        %v701 = vpack.c.b16 %v685, %v684
        %718 = vmatprep.subr.bf16.mxu0 0
        %719 = vmatpush1.bf16.msra.mxu0 %v686
        %720 = vmatprep.subr.bf16.mxu0 0
        %721 = vmatpush1.bf16.msra.mxu0 %v687
        %722 = vmatprep.subr.bf16.mxu0 0
        %723 = vmatpush1.bf16.msra.mxu0 %v688
        %724 = vmatprep.subr.bf16.mxu0 0
        %725 = vmatpush1.bf16.msra.mxu0 %v689
        %726 = vmatprep.subr.bf16.mxu0 0
        %727 = vmatpush1.bf16.msra.mxu0 %v690
        %728 = vmatprep.subr.bf16.mxu0 0
        %729 = vmatpush1.bf16.msra.mxu0 %v691
        %730 = vmatprep.subr.bf16.mxu0 0
        %731 = vmatpush1.bf16.msra.mxu0 %v692
        %732 = vmatprep.subr.bf16.mxu0 0
        %733 = vmatpush1.bf16.msra.mxu0 %v693
        %734 = vmatprep.subr.bf16.mxu0 0
        %735 = vmatpush1.bf16.msra.mxu0 %v694
        %736 = vmatprep.subr.bf16.mxu0 0
        %737 = vmatpush1.bf16.msra.mxu0 %v695
        %738 = vmatprep.subr.bf16.mxu0 0
        %739 = vmatpush1.bf16.msra.mxu0 %v696
        %740 = vmatprep.subr.bf16.mxu0 0
        %741 = vmatpush1.bf16.msra.mxu0 %v697
        %742 = vmatprep.subr.bf16.mxu0 0
        %743 = vmatpush1.bf16.msra.mxu0 %v698
        %744 = vmatprep.subr.bf16.mxu0 0
        %745 = vmatpush1.bf16.msra.mxu0 %v699
        %746 = vmatprep.subr.bf16.mxu0 0
        %747 = vmatpush1.bf16.msra.mxu0 %v700
        %748 = vmatprep.subr.bf16.mxu0 0
        %749 = vmatpush1.bf16.msra.mxu0 %v701
        %750 = vmatprep.mubr.bf16.mxu0 %v591
        %751 = vmatmul.mubr.bf16.gmra.mrb[0].mxu0 %v590
        %v752 = vpop.f32.mrb[0].mxu0
        %v753 = vadd.f32 %v540, %v752
        %v754 = vpop.f32.mrb[0].mxu0
        %v755 = vpop.f32.mrb[0].mxu0
        %v756 = vadd.f32 %v540, %v755
        %v757 = vpop.f32.mrb[0].mxu0
        %758 = vmatprep.mubr.bf16.mxu0 %v593
        %759 = vmatmul.mubr.bf16.gmra.mrb[0].mxu0 %v592
        %v760 = vpop.f32.mrb[0].mxu0
        %v761 = vadd.f32 %v540, %v760
        %v762 = vpop.f32.mrb[0].mxu0
        %v763 = vpop.f32.mrb[0].mxu0
        %v764 = vadd.f32 %v540, %v763
        %v765 = vpop.f32.mrb[0].mxu0
        %766 = vmatprep.mubr.bf16.mxu0 %v595
        %767 = vmatmul.mubr.bf16.gmra.mrb[0].mxu0 %v594
        %v768 = vpop.f32.mrb[0].mxu0
        %v769 = vadd.f32 %v540, %v768
        %v770 = vpop.f32.mrb[0].mxu0
        %v771 = vpop.f32.mrb[0].mxu0
        %v772 = vadd.f32 %v540, %v771
        %v773 = vpop.f32.mrb[0].mxu0
        %774 = vmatprep.mubr.bf16.mxu0 %v597
        %775 = vmatmul.mubr.bf16.gmra.mrb[0].mxu0 %v596
        %v776 = vpop.f32.mrb[0].mxu0
        %v777 = vadd.f32 %v540, %v776
        %v778 = vpop.f32.mrb[0].mxu0
        %v779 = vpop.f32.mrb[0].mxu0
        %v780 = vadd.f32 %v540, %v779
        %v781 = vpop.f32.mrb[0].mxu0
        %782 = vmatprep.mubr.bf16.mxu0 %v599
        %783 = vmatmul.mubr.bf16.gmra.mrb[0].mxu0 %v598
        %v784 = vpop.f32.mrb[0].mxu0
        %v785 = vadd.f32 %v540, %v784
        %v786 = vpop.f32.mrb[0].mxu0
        %v787 = vpop.f32.mrb[0].mxu0
        %v788 = vadd.f32 %v540, %v787
        %v789 = vpop.f32.mrb[0].mxu0
        %790 = vmatprep.mubr.bf16.mxu0 %v601
        %791 = vmatmul.mubr.bf16.gmra.mrb[0].mxu0 %v600
        %v792 = vpop.f32.mrb[0].mxu0
        %v793 = vadd.f32 %v540, %v792
        %v794 = vpop.f32.mrb[0].mxu0
        %v795 = vpop.f32.mrb[0].mxu0
        %v796 = vadd.f32 %v540, %v795
        %v797 = vpop.f32.mrb[0].mxu0
        %798 = vmatprep.mubr.bf16.mxu0 %v603
        %799 = vmatmul.mubr.bf16.gmra.mrb[0].mxu0 %v602
        %v800 = vpop.f32.mrb[0].mxu0
        %v801 = vadd.f32 %v540, %v800
        %v802 = vpop.f32.mrb[0].mxu0
        %v803 = vpop.f32.mrb[0].mxu0
        %v804 = vadd.f32 %v540, %v803
        %v805 = vpop.f32.mrb[0].mxu0
        %806 = vmatprep.mubr.bf16.mxu0 %v605
        %807 = vmatmul.mubr.bf16.gmra.mrb[0].mxu0 %v604
        %v808 = vpop.f32.mrb[0].mxu0
        %v809 = vadd.f32 %v540, %v808
        %v810 = vpop.f32.mrb[0].mxu0
        %v811 = vpop.f32.mrb[0].mxu0
        %v812 = vadd.f32 %v540, %v811
        %v813 = vpop.f32.mrb[0].mxu0
        %814 = vdwg.mxu0
        %v815 = vmax.f32 %v753, 0.0
        %v816 = vmax.f32 %v756, 0.0
        %v817 = vmax.f32 %v761, 0.0
        %v818 = vmax.f32 %v764, 0.0
        %v819 = vmax.f32 %v769, 0.0
        %v820 = vmax.f32 %v772, 0.0
        %v821 = vmax.f32 %v777, 0.0
        %v822 = vmax.f32 %v780, 0.0
        %v823 = vmax.f32 %v785, 0.0
        %v824 = vmax.f32 %v788, 0.0
        %v825 = vmax.f32 %v793, 0.0
        %v826 = vmax.f32 %v796, 0.0
        %v827 = vmax.f32 %v801, 0.0
        %v828 = vmax.f32 %v804, 0.0
        %v829 = vmax.f32 %v809, 0.0
        %v830 = vmax.f32 %v812, 0.0
        %v831 = vpack.c.bf16 %v816, %v815
        %v832 = vpack.c.bf16 %v818, %v817
        %v833 = vpack.c.bf16 %v820, %v819
        %v834 = vpack.c.bf16 %v822, %v821
        %v835 = vpack.c.bf16 %v824, %v823
        %v836 = vpack.c.bf16 %v826, %v825
        %v837 = vpack.c.bf16 %v828, %v827
        %v838 = vpack.c.bf16 %v830, %v829
        %v839 = vld [vmem:[#allocation7] sm:$0xf]
        %v840 = vld [vmem:[#allocation7 + $0x4] sm:$0xf]
        %v841 = vld [vmem:[#allocation7 + $0x8] sm:$0xf]
        %v842 = vld [vmem:[#allocation7 + $0xc] sm:$0xf]
        %v843 = vld [vmem:[#allocation7 + $0x10] sm:$0xf]
        %v844 = vld [vmem:[#allocation7 + $0x14] sm:$0xf]
        %v845 = vld [vmem:[#allocation7 + $0x18] sm:$0xf]
        %v846 = vld [vmem:[#allocation7 + $0x1c] sm:$0xf]
        %v847 = vld [vmem:[#allocation7 + $0x20] sm:$0xf]
        %v848 = vld [vmem:[#allocation7 + $0x24] sm:$0xf]
        %v849 = vld [vmem:[#allocation7 + $0x28] sm:$0xf]
        %v850 = vld [vmem:[#allocation7 + $0x2c] sm:$0xf]
        %v851 = vld [vmem:[#allocation7 + $0x30] sm:$0xf]
        %v852 = vld [vmem:[#allocation7 + $0x34] sm:$0xf]
        %v853 = vld [vmem:[#allocation7 + $0x38] sm:$0xf]
        %v854 = vld [vmem:[#allocation7 + $0x3c] sm:$0xf]
        %v855 = vld [vmem:[%s4] sm:$0x1]
        %v857 = vlaneseq
        %v858 = vshrl.u32 %v857, 7
        %v859 = vsub.s32 0, %v858
        %v860 = vrot.slane %v855, %v859
        %v878 = vunpack.c.l.b16 %v839
        %v879 = vunpack.c.l.b16 %v840
        %v880 = vunpack.c.l.b16 %v841
        %v881 = vunpack.c.l.b16 %v842
        %v882 = vunpack.c.l.b16 %v843
        %v883 = vunpack.c.l.b16 %v844
        %v884 = vunpack.c.l.b16 %v845
        %v885 = vunpack.c.l.b16 %v846
        %v886 = vunpack.c.l.b16 %v847
        %v887 = vunpack.c.l.b16 %v848
        %v888 = vunpack.c.l.b16 %v849
        %v889 = vunpack.c.l.b16 %v850
        %v890 = vunpack.c.l.b16 %v851
        %v891 = vunpack.c.l.b16 %v852
        %v892 = vunpack.c.l.b16 %v853
        %v893 = vunpack.c.l.b16 %v854
        %v894 = vpack.c.b16 %v879, %v878
        %v895 = vpack.c.b16 %v881, %v880
        %v896 = vpack.c.b16 %v883, %v882
        %v897 = vpack.c.b16 %v885, %v884
        %v898 = vpack.c.b16 %v887, %v886
        %v899 = vpack.c.b16 %v889, %v888
        %v900 = vpack.c.b16 %v891, %v890
        %v901 = vpack.c.b16 %v893, %v892
        %910 = vmatprep.subr.bf16.mxu0 0
        %911 = vmatpush1.bf16.msra.mxu0 %v894
        %912 = vmatprep.subr.bf16.mxu0 0
        %913 = vmatpush1.bf16.msra.mxu0 %v895
        %914 = vmatprep.subr.bf16.mxu0 0
        %915 = vmatpush1.bf16.msra.mxu0 %v896
        %916 = vmatprep.subr.bf16.mxu0 0
        %917 = vmatpush1.bf16.msra.mxu0 %v897
        %918 = vmatprep.subr.bf16.mxu0 0
        %919 = vmatpush1.bf16.msra.mxu0 %v898
        %920 = vmatprep.subr.bf16.mxu0 0
        %921 = vmatpush1.bf16.msra.mxu0 %v899
        %922 = vmatprep.subr.bf16.mxu0 0
        %923 = vmatpush1.bf16.msra.mxu0 %v900
        %924 = vmatprep.subr.bf16.mxu0 0
        %925 = vmatpush1.bf16.msra.mxu0 %v901
        %926 = vmatprep.subr.bf16.mxu0 0
        %927 = vmatpush1.bf16.msra.mxu0 0
        %928 = vmatprep.subr.bf16.mxu0 0
        %929 = vmatpush1.bf16.msra.mxu0 0
        %930 = vmatprep.subr.bf16.mxu0 0
        %931 = vmatpush1.bf16.msra.mxu0 0
        %932 = vmatprep.subr.bf16.mxu0 0
        %933 = vmatpush1.bf16.msra.mxu0 0
        %934 = vmatprep.subr.bf16.mxu0 0
        %935 = vmatpush1.bf16.msra.mxu0 0
        %936 = vmatprep.subr.bf16.mxu0 0
        %937 = vmatpush1.bf16.msra.mxu0 0
        %938 = vmatprep.subr.bf16.mxu0 0
        %939 = vmatpush1.bf16.msra.mxu0 0
        %940 = vmatprep.subr.bf16.mxu0 0
        %941 = vmatpush1.bf16.msra.mxu0 0
        %942 = vmatprep.mubr.bf16.mxu0 0
        %943 = vmatmul.mubr.bf16.gmra.mrb[0].mxu0 %v831
        %v944 = vpop.f32.mrb[0].mxu0
        %v945 = vadd.f32 %v860, %v944
        %v946 = vpop.f32.mrb[0].mxu0
        %v947 = vpop.f32.mrb[0].mxu0
        %v948 = vadd.f32 %v860, %v947
        %v949 = vpop.f32.mrb[0].mxu0
        %950 = vmatprep.mubr.bf16.mxu0 0
        %951 = vmatmul.mubr.bf16.gmra.mrb[0].mxu0 %v832
        %v952 = vpop.f32.mrb[0].mxu0
        %v953 = vadd.f32 %v860, %v952
        %v954 = vpop.f32.mrb[0].mxu0
        %v955 = vpop.f32.mrb[0].mxu0
        %v956 = vadd.f32 %v860, %v955
        %v957 = vpop.f32.mrb[0].mxu0
        %958 = vmatprep.mubr.bf16.mxu0 0
        %959 = vmatmul.mubr.bf16.gmra.mrb[0].mxu0 %v833
        %v960 = vpop.f32.mrb[0].mxu0
        %v961 = vadd.f32 %v860, %v960
        %v962 = vpop.f32.mrb[0].mxu0
        %v963 = vpop.f32.mrb[0].mxu0
        %v964 = vadd.f32 %v860, %v963
        %v965 = vpop.f32.mrb[0].mxu0
        %966 = vmatprep.mubr.bf16.mxu0 0
        %967 = vmatmul.mubr.bf16.gmra.mrb[0].mxu0 %v834
        %v968 = vpop.f32.mrb[0].mxu0
        %v969 = vadd.f32 %v860, %v968
        %v970 = vpop.f32.mrb[0].mxu0
        %v971 = vpop.f32.mrb[0].mxu0
        %v972 = vadd.f32 %v860, %v971
        %v973 = vpop.f32.mrb[0].mxu0
        %974 = vmatprep.mubr.bf16.mxu0 0
        %975 = vmatmul.mubr.bf16.gmra.mrb[0].mxu0 %v835
        %v976 = vpop.f32.mrb[0].mxu0
        %v977 = vadd.f32 %v860, %v976
        %v978 = vpop.f32.mrb[0].mxu0
        %v979 = vpop.f32.mrb[0].mxu0
        %v980 = vadd.f32 %v860, %v979
        %v981 = vpop.f32.mrb[0].mxu0
        %982 = vmatprep.mubr.bf16.mxu0 0
        %983 = vmatmul.mubr.bf16.gmra.mrb[0].mxu0 %v836
        %v984 = vpop.f32.mrb[0].mxu0
        %v985 = vadd.f32 %v860, %v984
        %v986 = vpop.f32.mrb[0].mxu0
        %v987 = vpop.f32.mrb[0].mxu0
        %v988 = vadd.f32 %v860, %v987
        %v989 = vpop.f32.mrb[0].mxu0
        %990 = vmatprep.mubr.bf16.mxu0 0
        %991 = vmatmul.mubr.bf16.gmra.mrb[0].mxu0 %v837
        %v992 = vpop.f32.mrb[0].mxu0
        %v993 = vadd.f32 %v860, %v992
        %v994 = vpop.f32.mrb[0].mxu0
        %v995 = vpop.f32.mrb[0].mxu0
        %v996 = vadd.f32 %v860, %v995
        %v997 = vpop.f32.mrb[0].mxu0
        %998 = vmatprep.mubr.bf16.mxu0 0
        %999 = vmatmul.mubr.bf16.gmra.mrb[0].mxu0 %v838
        %v1000 = vpop.f32.mrb[0].mxu0
        %v1001 = vadd.f32 %v860, %v1000
        %v1002 = vpop.f32.mrb[0].mxu0
        %v1003 = vpop.f32.mrb[0].mxu0
        %v1004 = vadd.f32 %v860, %v1003
        %v1005 = vpop.f32.mrb[0].mxu0
        %1006 = vdwg.mxu0
        %v1007 = vpack.c.bf16 %v948, %v945
        %v1008 = vpack.c.bf16 %v956, %v953
        %v1009 = vpack.c.bf16 %v964, %v961
        %v1010 = vpack.c.bf16 %v972, %v969
        %v1011 = vpack.c.bf16 %v980, %v977
        %v1012 = vpack.c.bf16 %v988, %v985
        %v1013 = vpack.c.bf16 %v996, %v993
        %v1014 = vpack.c.bf16 %v1004, %v1001
        %v1015 = vld [vmem:[#allocation8] sm:$0xf]
        %v1016 = vld [vmem:[#allocation8 + $0x4] sm:$0xf]
        %v1017 = vld [vmem:[#allocation8 + $0x8] sm:$0xf]
        %v1018 = vld [vmem:[#allocation8 + $0xc] sm:$0xf]
        %v1019 = vld [vmem:[#allocation8 + $0x10] sm:$0xf]
        %v1020 = vld [vmem:[#allocation8 + $0x14] sm:$0xf]
        %v1021 = vld [vmem:[#allocation8 + $0x18] sm:$0xf]
        %v1022 = vld [vmem:[#allocation8 + $0x1c] sm:$0xf]
        %v1023 = vld [vmem:[#allocation8 + $0x20] sm:$0xf]
        %v1024 = vld [vmem:[#allocation8 + $0x24] sm:$0xf]
        %v1025 = vld [vmem:[#allocation8 + $0x28] sm:$0xf]
        %v1026 = vld [vmem:[#allocation8 + $0x2c] sm:$0xf]
        %v1027 = vld [vmem:[#allocation8 + $0x30] sm:$0xf]
        %v1028 = vld [vmem:[#allocation8 + $0x34] sm:$0xf]
        %v1029 = vld [vmem:[#allocation8 + $0x38] sm:$0xf]
        %v1030 = vld [vmem:[#allocation8 + $0x3c] sm:$0xf]
        %v1031 = vld [vmem:[%s6] sm:$0x1]
        %v1033 = vlaneseq
        %v1034 = vshrl.u32 %v1033, 7
        %v1035 = vsub.s32 0, %v1034
        %v1036 = vrot.slane %v1031, %v1035
        %v1054 = vunpack.c.l.b16 %v1015
        %v1055 = vunpack.c.l.b16 %v1016
        %v1056 = vunpack.c.l.b16 %v1017
        %v1057 = vunpack.c.l.b16 %v1018
        %v1058 = vunpack.c.l.b16 %v1019
        %v1059 = vunpack.c.l.b16 %v1020
        %v1060 = vunpack.c.l.b16 %v1021
        %v1061 = vunpack.c.l.b16 %v1022
        %v1062 = vunpack.c.l.b16 %v1023
        %v1063 = vunpack.c.l.b16 %v1024
        %v1064 = vunpack.c.l.b16 %v1025
        %v1065 = vunpack.c.l.b16 %v1026
        %v1066 = vunpack.c.l.b16 %v1027
        %v1067 = vunpack.c.l.b16 %v1028
        %v1068 = vunpack.c.l.b16 %v1029
        %v1069 = vunpack.c.l.b16 %v1030
        %v1070 = vpack.c.b16 %v1055, %v1054
        %v1071 = vpack.c.b16 %v1057, %v1056
        %v1072 = vpack.c.b16 %v1059, %v1058
        %v1073 = vpack.c.b16 %v1061, %v1060
        %v1074 = vpack.c.b16 %v1063, %v1062
        %v1075 = vpack.c.b16 %v1065, %v1064
        %v1076 = vpack.c.b16 %v1067, %v1066
        %v1077 = vpack.c.b16 %v1069, %v1068
        %1086 = vmatprep.subr.bf16.mxu0 0
        %1087 = vmatpush1.bf16.msra.mxu0 %v1070
        %1088 = vmatprep.subr.bf16.mxu0 0
        %1089 = vmatpush1.bf16.msra.mxu0 %v1071
        %1090 = vmatprep.subr.bf16.mxu0 0
        %1091 = vmatpush1.bf16.msra.mxu0 %v1072
        %1092 = vmatprep.subr.bf16.mxu0 0
        %1093 = vmatpush1.bf16.msra.mxu0 %v1073
        %1094 = vmatprep.subr.bf16.mxu0 0
        %1095 = vmatpush1.bf16.msra.mxu0 %v1074
        %1096 = vmatprep.subr.bf16.mxu0 0
        %1097 = vmatpush1.bf16.msra.mxu0 %v1075
        %1098 = vmatprep.subr.bf16.mxu0 0
        %1099 = vmatpush1.bf16.msra.mxu0 %v1076
        %1100 = vmatprep.subr.bf16.mxu0 0
        %1101 = vmatpush1.bf16.msra.mxu0 %v1077
        %1102 = vmatprep.subr.bf16.mxu0 0
        %1103 = vmatpush1.bf16.msra.mxu0 0
        %1104 = vmatprep.subr.bf16.mxu0 0
        %1105 = vmatpush1.bf16.msra.mxu0 0
        %1106 = vmatprep.subr.bf16.mxu0 0
        %1107 = vmatpush1.bf16.msra.mxu0 0
        %1108 = vmatprep.subr.bf16.mxu0 0
        %1109 = vmatpush1.bf16.msra.mxu0 0
        %1110 = vmatprep.subr.bf16.mxu0 0
        %1111 = vmatpush1.bf16.msra.mxu0 0
        %1112 = vmatprep.subr.bf16.mxu0 0
        %1113 = vmatpush1.bf16.msra.mxu0 0
        %1114 = vmatprep.subr.bf16.mxu0 0
        %1115 = vmatpush1.bf16.msra.mxu0 0
        %1116 = vmatprep.subr.bf16.mxu0 0
        %1117 = vmatpush1.bf16.msra.mxu0 0
        %1118 = vmatprep.mubr.bf16.mxu0 0
        %1119 = vmatmul.mubr.bf16.gmra.mrb[0].mxu0 %v1007
        %v1120 = vpop.f32.mrb[0].mxu0
        %v1121 = vadd.f32 %v1036, %v1120
        %v1122 = vpop.f32.mrb[0].mxu0
        %v1123 = vpop.f32.mrb[0].mxu0
        %v1124 = vadd.f32 %v1036, %v1123
        %v1125 = vpop.f32.mrb[0].mxu0
        %1126 = vmatprep.mubr.bf16.mxu0 0
        %1127 = vmatmul.mubr.bf16.gmra.mrb[0].mxu0 %v1008
        %v1128 = vpop.f32.mrb[0].mxu0
        %v1129 = vadd.f32 %v1036, %v1128
        %v1130 = vpop.f32.mrb[0].mxu0
        %v1131 = vpop.f32.mrb[0].mxu0
        %v1132 = vadd.f32 %v1036, %v1131
        %v1133 = vpop.f32.mrb[0].mxu0
        %1134 = vmatprep.mubr.bf16.mxu0 0
        %1135 = vmatmul.mubr.bf16.gmra.mrb[0].mxu0 %v1009
        %v1136 = vpop.f32.mrb[0].mxu0
        %v1137 = vadd.f32 %v1036, %v1136
        %v1138 = vpop.f32.mrb[0].mxu0
        %v1139 = vpop.f32.mrb[0].mxu0
        %v1140 = vadd.f32 %v1036, %v1139
        %v1141 = vpop.f32.mrb[0].mxu0
        %1142 = vmatprep.mubr.bf16.mxu0 0
        %1143 = vmatmul.mubr.bf16.gmra.mrb[0].mxu0 %v1010
        %v1144 = vpop.f32.mrb[0].mxu0
        %v1145 = vadd.f32 %v1036, %v1144
        %v1146 = vpop.f32.mrb[0].mxu0
        %v1147 = vpop.f32.mrb[0].mxu0
        %v1148 = vadd.f32 %v1036, %v1147
        %v1149 = vpop.f32.mrb[0].mxu0
        %1150 = vmatprep.mubr.bf16.mxu0 0
        %1151 = vmatmul.mubr.bf16.gmra.mrb[0].mxu0 %v1011
        %v1152 = vpop.f32.mrb[0].mxu0
        %v1153 = vadd.f32 %v1036, %v1152
        %v1154 = vpop.f32.mrb[0].mxu0
        %v1155 = vpop.f32.mrb[0].mxu0
        %v1156 = vadd.f32 %v1036, %v1155
        %v1157 = vpop.f32.mrb[0].mxu0
        %1158 = vmatprep.mubr.bf16.mxu0 0
        %1159 = vmatmul.mubr.bf16.gmra.mrb[0].mxu0 %v1012
        %v1160 = vpop.f32.mrb[0].mxu0
        %v1161 = vadd.f32 %v1036, %v1160
        %v1162 = vpop.f32.mrb[0].mxu0
        %v1163 = vpop.f32.mrb[0].mxu0
        %v1164 = vadd.f32 %v1036, %v1163
        %v1165 = vpop.f32.mrb[0].mxu0
        %1166 = vmatprep.mubr.bf16.mxu0 0
        %1167 = vmatmul.mubr.bf16.gmra.mrb[0].mxu0 %v1013
        %v1168 = vpop.f32.mrb[0].mxu0
        %v1169 = vadd.f32 %v1036, %v1168
        %v1170 = vpop.f32.mrb[0].mxu0
        %v1171 = vpop.f32.mrb[0].mxu0
        %v1172 = vadd.f32 %v1036, %v1171
        %v1173 = vpop.f32.mrb[0].mxu0
        %1174 = vmatprep.mubr.bf16.mxu0 0
        %1175 = vmatmul.mubr.bf16.gmra.mrb[0].mxu0 %v1014
        %v1176 = vpop.f32.mrb[0].mxu0
        %v1177 = vadd.f32 %v1036, %v1176
        %v1178 = vpop.f32.mrb[0].mxu0
        %v1179 = vpop.f32.mrb[0].mxu0
        %v1180 = vadd.f32 %v1036, %v1179
        %v1181 = vpop.f32.mrb[0].mxu0
        %1182 = vdwg.mxu0
        %v1183 = vmax.f32 %v1121, 0.0
        %v1184 = vmax.f32 %v1124, 0.0
        %v1185 = vmax.f32 %v1129, 0.0
        %v1186 = vmax.f32 %v1132, 0.0
        %v1187 = vmax.f32 %v1137, 0.0
        %v1188 = vmax.f32 %v1140, 0.0
        %v1189 = vmax.f32 %v1145, 0.0
        %v1190 = vmax.f32 %v1148, 0.0
        %v1191 = vmax.f32 %v1153, 0.0
        %v1192 = vmax.f32 %v1156, 0.0
        %v1193 = vmax.f32 %v1161, 0.0
        %v1194 = vmax.f32 %v1164, 0.0
        %v1195 = vmax.f32 %v1169, 0.0
        %v1196 = vmax.f32 %v1172, 0.0
        %v1197 = vmax.f32 %v1177, 0.0
        %v1198 = vmax.f32 %v1180, 0.0
        %v1199 = vpack.c.bf16 %v1184, %v1183
        %v1200 = vpack.c.bf16 %v1186, %v1185
        %v1201 = vpack.c.bf16 %v1188, %v1187
        %v1202 = vpack.c.bf16 %v1190, %v1189
        %v1203 = vpack.c.bf16 %v1192, %v1191
        %v1204 = vpack.c.bf16 %v1194, %v1193
        %v1205 = vpack.c.bf16 %v1196, %v1195
        %v1206 = vpack.c.bf16 %v1198, %v1197
        %v1207 = vld [vmem:[#allocation10] sm:$0xff]
        %v1208 = vld [vmem:[#allocation10 + $0x8] sm:$0xff]
        %v1209 = vld [vmem:[#allocation10 + $0x10] sm:$0xff]
        %v1210 = vld [vmem:[#allocation10 + $0x18] sm:$0xff]
        %v1211 = vld [vmem:[#allocation10 + $0x20] sm:$0xff]
        %v1212 = vld [vmem:[#allocation10 + $0x28] sm:$0xff]
        %v1213 = vld [vmem:[#allocation10 + $0x30] sm:$0xff]
        %v1214 = vld [vmem:[#allocation10 + $0x38] sm:$0xff]
        %v1215 = vld [vmem:[#allocation10 + $0x40] sm:$0xff]
        %v1216 = vld [vmem:[#allocation10 + $0x48] sm:$0xff]
        %v1217 = vld [vmem:[#allocation10 + $0x50] sm:$0xff]
        %v1218 = vld [vmem:[#allocation10 + $0x58] sm:$0xff]
        %v1219 = vld [vmem:[#allocation10 + $0x60] sm:$0xff]
        %v1220 = vld [vmem:[#allocation10 + $0x68] sm:$0xff]
        %v1221 = vld [vmem:[#allocation10 + $0x70] sm:$0xff]
        %v1222 = vld [vmem:[#allocation10 + $0x78] sm:$0xff]
        %v1223 = vld [vmem:[%s8] sm:$0x3]
        %v1225 = vlaneseq
        %v1226 = vshrl.u32 %v1225, 7
        %v1227 = vsub.s32 0, %v1226
        %v1228 = vrot.slane %v1223, %v1227
        %v1229 = vlaneseq
        %v1230 = vshrl.u32 %v1229, 7
        %v1231 = vsub.s32 1, %v1230
        %v1232 = vrot.slane %v1223, %v1231
        %v1251 = vunpack.c.l.b16 %v1207
        %v1252 = vunpack.c.h.b16 %v1207
        %v1253 = vunpack.c.l.b16 %v1208
        %v1254 = vunpack.c.h.b16 %v1208
        %v1255 = vunpack.c.l.b16 %v1209
        %v1256 = vunpack.c.h.b16 %v1209
        %v1257 = vunpack.c.l.b16 %v1210
        %v1258 = vunpack.c.h.b16 %v1210
        %v1259 = vunpack.c.l.b16 %v1211
        %v1260 = vunpack.c.h.b16 %v1211
        %v1261 = vunpack.c.l.b16 %v1212
        %v1262 = vunpack.c.h.b16 %v1212
        %v1263 = vunpack.c.l.b16 %v1213
        %v1264 = vunpack.c.h.b16 %v1213
        %v1265 = vunpack.c.l.b16 %v1214
        %v1266 = vunpack.c.h.b16 %v1214
        %v1267 = vunpack.c.l.b16 %v1215
        %v1268 = vunpack.c.h.b16 %v1215
        %v1269 = vunpack.c.l.b16 %v1216
        %v1270 = vunpack.c.h.b16 %v1216
        %v1271 = vunpack.c.l.b16 %v1217
        %v1272 = vunpack.c.h.b16 %v1217
        %v1273 = vunpack.c.l.b16 %v1218
        %v1274 = vunpack.c.h.b16 %v1218
        %v1275 = vunpack.c.l.b16 %v1219
        %v1276 = vunpack.c.h.b16 %v1219
        %v1277 = vunpack.c.l.b16 %v1220
        %v1278 = vunpack.c.h.b16 %v1220
        %v1279 = vunpack.c.l.b16 %v1221
        %v1280 = vunpack.c.h.b16 %v1221
        %v1281 = vunpack.c.l.b16 %v1222
        %v1282 = vunpack.c.h.b16 %v1222
        %v1283 = vpack.c.b16 %v1253, %v1251
        %v1284 = vpack.c.b16 %v1254, %v1252
        %v1285 = vpack.c.b16 %v1257, %v1255
        %v1286 = vpack.c.b16 %v1258, %v1256
        %v1287 = vpack.c.b16 %v1261, %v1259
        %v1288 = vpack.c.b16 %v1262, %v1260
        %v1289 = vpack.c.b16 %v1265, %v1263
        %v1290 = vpack.c.b16 %v1266, %v1264
        %v1291 = vpack.c.b16 %v1269, %v1267
        %v1292 = vpack.c.b16 %v1270, %v1268
        %v1293 = vpack.c.b16 %v1273, %v1271
        %v1294 = vpack.c.b16 %v1274, %v1272
        %v1295 = vpack.c.b16 %v1277, %v1275
        %v1296 = vpack.c.b16 %v1278, %v1276
        %v1297 = vpack.c.b16 %v1281, %v1279
        %v1298 = vpack.c.b16 %v1282, %v1280
        %1315 = vmatprep.subr.bf16.mxu0 %v1284
        %1316 = vmatpush1.bf16.msra.mxu0 %v1283
        %1317 = vmatprep.subr.bf16.mxu0 %v1286
        %1318 = vmatpush1.bf16.msra.mxu0 %v1285
        %1319 = vmatprep.subr.bf16.mxu0 %v1288
        %1320 = vmatpush1.bf16.msra.mxu0 %v1287
        %1321 = vmatprep.subr.bf16.mxu0 %v1290
        %1322 = vmatpush1.bf16.msra.mxu0 %v1289
        %1323 = vmatprep.subr.bf16.mxu0 %v1292
        %1324 = vmatpush1.bf16.msra.mxu0 %v1291
        %1325 = vmatprep.subr.bf16.mxu0 %v1294
        %1326 = vmatpush1.bf16.msra.mxu0 %v1293
        %1327 = vmatprep.subr.bf16.mxu0 %v1296
        %1328 = vmatpush1.bf16.msra.mxu0 %v1295
        %1329 = vmatprep.subr.bf16.mxu0 %v1298
        %1330 = vmatpush1.bf16.msra.mxu0 %v1297
        %1331 = vmatprep.subr.bf16.mxu0 0
        %1332 = vmatpush1.bf16.msra.mxu0 0
        %1333 = vmatprep.subr.bf16.mxu0 0
        %1334 = vmatpush1.bf16.msra.mxu0 0
        %1335 = vmatprep.subr.bf16.mxu0 0
        %1336 = vmatpush1.bf16.msra.mxu0 0
        %1337 = vmatprep.subr.bf16.mxu0 0
        %1338 = vmatpush1.bf16.msra.mxu0 0
        %1339 = vmatprep.subr.bf16.mxu0 0
        %1340 = vmatpush1.bf16.msra.mxu0 0
        %1341 = vmatprep.subr.bf16.mxu0 0
        %1342 = vmatpush1.bf16.msra.mxu0 0
        %1343 = vmatprep.subr.bf16.mxu0 0
        %1344 = vmatpush1.bf16.msra.mxu0 0
        %1345 = vmatprep.subr.bf16.mxu0 0
        %1346 = vmatpush1.bf16.msra.mxu0 0
        %1347 = vmatprep.mubr.bf16.mxu0 0
        %1348 = vmatmul.mubr.bf16.gmra.mrb[0].mxu0 %v1199
        %v1349 = vpop.f32.mrb[0].mxu0
        %v1350 = vadd.f32 %v1228, %v1349
        %v1351 = vpop.f32.mrb[0].mxu0
        %v1352 = vadd.f32 %v1232, %v1351
        %v1353 = vpop.f32.mrb[0].mxu0
        %v1354 = vadd.f32 %v1228, %v1353
        %v1355 = vpop.f32.mrb[0].mxu0
        %v1356 = vadd.f32 %v1232, %v1355
        %1357 = vmatprep.mubr.bf16.mxu0 0
        %1358 = vmatmul.mubr.bf16.gmra.mrb[0].mxu0 %v1200
        %v1359 = vpop.f32.mrb[0].mxu0
        %v1360 = vadd.f32 %v1228, %v1359
        %v1361 = vpop.f32.mrb[0].mxu0
        %v1362 = vadd.f32 %v1232, %v1361
        %v1363 = vpop.f32.mrb[0].mxu0
        %v1364 = vadd.f32 %v1228, %v1363
        %v1365 = vpop.f32.mrb[0].mxu0
        %v1366 = vadd.f32 %v1232, %v1365
        %1367 = vmatprep.mubr.bf16.mxu0 0
        %1368 = vmatmul.mubr.bf16.gmra.mrb[0].mxu0 %v1201
        %v1369 = vpop.f32.mrb[0].mxu0
        %v1370 = vadd.f32 %v1228, %v1369
        %v1371 = vpop.f32.mrb[0].mxu0
        %v1372 = vadd.f32 %v1232, %v1371
        %v1373 = vpop.f32.mrb[0].mxu0
        %v1374 = vadd.f32 %v1228, %v1373
        %v1375 = vpop.f32.mrb[0].mxu0
        %v1376 = vadd.f32 %v1232, %v1375
        %1377 = vmatprep.mubr.bf16.mxu0 0
        %1378 = vmatmul.mubr.bf16.gmra.mrb[0].mxu0 %v1202
        %v1379 = vpop.f32.mrb[0].mxu0
        %v1380 = vadd.f32 %v1228, %v1379
        %v1381 = vpop.f32.mrb[0].mxu0
        %v1382 = vadd.f32 %v1232, %v1381
        %v1383 = vpop.f32.mrb[0].mxu0
        %v1384 = vadd.f32 %v1228, %v1383
        %v1385 = vpop.f32.mrb[0].mxu0
        %v1386 = vadd.f32 %v1232, %v1385
        %1387 = vmatprep.mubr.bf16.mxu0 0
        %1388 = vmatmul.mubr.bf16.gmra.mrb[0].mxu0 %v1203
        %v1389 = vpop.f32.mrb[0].mxu0
        %v1390 = vadd.f32 %v1228, %v1389
        %v1391 = vpop.f32.mrb[0].mxu0
        %v1392 = vadd.f32 %v1232, %v1391
        %v1393 = vpop.f32.mrb[0].mxu0
        %v1394 = vadd.f32 %v1228, %v1393
        %v1395 = vpop.f32.mrb[0].mxu0
        %v1396 = vadd.f32 %v1232, %v1395
        %1397 = vmatprep.mubr.bf16.mxu0 0
        %1398 = vmatmul.mubr.bf16.gmra.mrb[0].mxu0 %v1204
        %v1399 = vpop.f32.mrb[0].mxu0
        %v1400 = vadd.f32 %v1228, %v1399
        %v1401 = vpop.f32.mrb[0].mxu0
        %v1402 = vadd.f32 %v1232, %v1401
        %v1403 = vpop.f32.mrb[0].mxu0
        %v1404 = vadd.f32 %v1228, %v1403
        %v1405 = vpop.f32.mrb[0].mxu0
        %v1406 = vadd.f32 %v1232, %v1405
        %1407 = vmatprep.mubr.bf16.mxu0 0
        %1408 = vmatmul.mubr.bf16.gmra.mrb[0].mxu0 %v1205
        %v1409 = vpop.f32.mrb[0].mxu0
        %v1410 = vadd.f32 %v1228, %v1409
        %v1411 = vpop.f32.mrb[0].mxu0
        %v1412 = vadd.f32 %v1232, %v1411
        %v1413 = vpop.f32.mrb[0].mxu0
        %v1414 = vadd.f32 %v1228, %v1413
        %v1415 = vpop.f32.mrb[0].mxu0
        %v1416 = vadd.f32 %v1232, %v1415
        %1417 = vmatprep.mubr.bf16.mxu0 0
        %1418 = vmatmul.mubr.bf16.gmra.mrb[0].mxu0 %v1206
        %v1419 = vpop.f32.mrb[0].mxu0
        %v1420 = vadd.f32 %v1228, %v1419
        %v1421 = vpop.f32.mrb[0].mxu0
        %v1422 = vadd.f32 %v1232, %v1421
        %v1423 = vpop.f32.mrb[0].mxu0
        %v1424 = vadd.f32 %v1228, %v1423
        %v1425 = vpop.f32.mrb[0].mxu0
        %v1426 = vadd.f32 %v1232, %v1425
        %1427 = vdwg.mxu0
        %v1436 = vunpack.c.l.b16 %v1007
        %v1437 = vunpack.c.h.b16 %v1007
        %v1438 = vunpack.c.l.b16 %v1008
        %v1439 = vunpack.c.h.b16 %v1008
        %v1440 = vunpack.c.l.b16 %v1009
        %v1441 = vunpack.c.h.b16 %v1009
        %v1442 = vunpack.c.l.b16 %v1010
        %v1443 = vunpack.c.h.b16 %v1010
        %v1444 = vunpack.c.l.b16 %v1011
        %v1445 = vunpack.c.h.b16 %v1011
        %v1446 = vunpack.c.l.b16 %v1012
        %v1447 = vunpack.c.h.b16 %v1012
        %v1448 = vunpack.c.l.b16 %v1013
        %v1449 = vunpack.c.h.b16 %v1013
        %v1450 = vunpack.c.l.b16 %v1014
        %v1451 = vunpack.c.h.b16 %v1014
        %v1452 = vpack.c.b16 %v1436, %v1436
        %v1453 = vpack.c.b16 %v1437, %v1437
        %v1454 = vpack.c.b16 %v1438, %v1438
        %v1455 = vpack.c.b16 %v1439, %v1439
        %v1456 = vpack.c.b16 %v1440, %v1440
        %v1457 = vpack.c.b16 %v1441, %v1441
        %v1458 = vpack.c.b16 %v1442, %v1442
        %v1459 = vpack.c.b16 %v1443, %v1443
        %v1460 = vpack.c.b16 %v1444, %v1444
        %v1461 = vpack.c.b16 %v1445, %v1445
        %v1462 = vpack.c.b16 %v1446, %v1446
        %v1463 = vpack.c.b16 %v1447, %v1447
        %v1464 = vpack.c.b16 %v1448, %v1448
        %v1465 = vpack.c.b16 %v1449, %v1449
        %v1466 = vpack.c.b16 %v1450, %v1450
        %v1467 = vpack.c.b16 %v1451, %v1451
        %1484 = vst [vmem:[%s474] sm:$0xf] %v1452
        %1485 = vst [vmem:[%s474 + $0x4] sm:$0xf] %v1453
        %1486 = vst [vmem:[%s474 + $0x8] sm:$0xf] %v1454
        %1487 = vst [vmem:[%s474 + $0xc] sm:$0xf] %v1455
        %1488 = vst [vmem:[%s474 + $0x10] sm:$0xf] %v1456
        %1489 = vst [vmem:[%s474 + $0x14] sm:$0xf] %v1457
        %1490 = vst [vmem:[%s474 + $0x18] sm:$0xf] %v1458
        %1491 = vst [vmem:[%s474 + $0x1c] sm:$0xf] %v1459
        %1492 = vst [vmem:[%s474 + $0x20] sm:$0xf] %v1460
        %1493 = vst [vmem:[%s474 + $0x24] sm:$0xf] %v1461
        %1494 = vst [vmem:[%s474 + $0x28] sm:$0xf] %v1462
        %1495 = vst [vmem:[%s474 + $0x2c] sm:$0xf] %v1463
        %1496 = vst [vmem:[%s474 + $0x30] sm:$0xf] %v1464
        %1497 = vst [vmem:[%s474 + $0x34] sm:$0xf] %v1465
        %1498 = vst [vmem:[%s474 + $0x38] sm:$0xf] %v1466
        %1499 = vst [vmem:[%s474 + $0x3c] sm:$0xf] %v1467
        %v1508 = vunpack.c.l.b16 %v1199
        %v1509 = vunpack.c.h.b16 %v1199
        %v1510 = vunpack.c.l.b16 %v1200
        %v1511 = vunpack.c.h.b16 %v1200
        %v1512 = vunpack.c.l.b16 %v1201
        %v1513 = vunpack.c.h.b16 %v1201
        %v1514 = vunpack.c.l.b16 %v1202
        %v1515 = vunpack.c.h.b16 %v1202
        %v1516 = vunpack.c.l.b16 %v1203
        %v1517 = vunpack.c.h.b16 %v1203
        %v1518 = vunpack.c.l.b16 %v1204
        %v1519 = vunpack.c.h.b16 %v1204
        %v1520 = vunpack.c.l.b16 %v1205
        %v1521 = vunpack.c.h.b16 %v1205
        %v1522 = vunpack.c.l.b16 %v1206
        %v1523 = vunpack.c.h.b16 %v1206
        %v1524 = vpack.c.b16 %v1508, %v1508
        %v1525 = vpack.c.b16 %v1509, %v1509
        %v1526 = vpack.c.b16 %v1510, %v1510
        %v1527 = vpack.c.b16 %v1511, %v1511
        %v1528 = vpack.c.b16 %v1512, %v1512
        %v1529 = vpack.c.b16 %v1513, %v1513
        %v1530 = vpack.c.b16 %v1514, %v1514
        %v1531 = vpack.c.b16 %v1515, %v1515
        %v1532 = vpack.c.b16 %v1516, %v1516
        %v1533 = vpack.c.b16 %v1517, %v1517
        %v1534 = vpack.c.b16 %v1518, %v1518
        %v1535 = vpack.c.b16 %v1519, %v1519
        %v1536 = vpack.c.b16 %v1520, %v1520
        %v1537 = vpack.c.b16 %v1521, %v1521
        %v1538 = vpack.c.b16 %v1522, %v1522
        %v1539 = vpack.c.b16 %v1523, %v1523
        %1556 = vst [vmem:[%s481] sm:$0xf] %v1524
        %1557 = vst [vmem:[%s481 + $0x4] sm:$0xf] %v1525
        %1558 = vst [vmem:[%s481 + $0x8] sm:$0xf] %v1526
        %1559 = vst [vmem:[%s481 + $0xc] sm:$0xf] %v1527
        %1560 = vst [vmem:[%s481 + $0x10] sm:$0xf] %v1528
        %1561 = vst [vmem:[%s481 + $0x14] sm:$0xf] %v1529
        %1562 = vst [vmem:[%s481 + $0x18] sm:$0xf] %v1530
        %1563 = vst [vmem:[%s481 + $0x1c] sm:$0xf] %v1531
        %1564 = vst [vmem:[%s481 + $0x20] sm:$0xf] %v1532
        %1565 = vst [vmem:[%s481 + $0x24] sm:$0xf] %v1533
        %1566 = vst [vmem:[%s481 + $0x28] sm:$0xf] %v1534
        %1567 = vst [vmem:[%s481 + $0x2c] sm:$0xf] %v1535
        %1568 = vst [vmem:[%s481 + $0x30] sm:$0xf] %v1536
        %1569 = vst [vmem:[%s481 + $0x34] sm:$0xf] %v1537
        %1570 = vst [vmem:[%s481 + $0x38] sm:$0xf] %v1538
        %1571 = vst [vmem:[%s481 + $0x3c] sm:$0xf] %v1539
        %v1572 = vpack.c.bf16 %v1354, %v1350
        %v1573 = vpack.c.bf16 %v1356, %v1352
        %v1574 = vpack.c.bf16 %v1364, %v1360
        %v1575 = vpack.c.bf16 %v1366, %v1362
        %v1576 = vpack.c.bf16 %v1374, %v1370
        %v1577 = vpack.c.bf16 %v1376, %v1372
        %v1578 = vpack.c.bf16 %v1384, %v1380
        %v1579 = vpack.c.bf16 %v1386, %v1382
        %v1580 = vpack.c.bf16 %v1394, %v1390
        %v1581 = vpack.c.bf16 %v1396, %v1392
        %v1582 = vpack.c.bf16 %v1404, %v1400
        %v1583 = vpack.c.bf16 %v1406, %v1402
        %v1584 = vpack.c.bf16 %v1414, %v1410
        %v1585 = vpack.c.bf16 %v1416, %v1412
        %v1586 = vpack.c.bf16 %v1424, %v1420
        %v1587 = vpack.c.bf16 %v1426, %v1422
        %v1604 = vunpack.c.l.b16 %v1572
        %v1605 = vunpack.c.l.b16 %v1573
        %v1606 = vunpack.c.h.b16 %v1572
        %v1607 = vunpack.c.h.b16 %v1573
        %v1608 = vunpack.c.l.b16 %v1574
        %v1609 = vunpack.c.l.b16 %v1575
        %v1610 = vunpack.c.h.b16 %v1574
        %v1611 = vunpack.c.h.b16 %v1575
        %v1612 = vunpack.c.l.b16 %v1576
        %v1613 = vunpack.c.l.b16 %v1577
        %v1614 = vunpack.c.h.b16 %v1576
        %v1615 = vunpack.c.h.b16 %v1577
        %v1616 = vunpack.c.l.b16 %v1578
        %v1617 = vunpack.c.l.b16 %v1579
        %v1618 = vunpack.c.h.b16 %v1578
        %v1619 = vunpack.c.h.b16 %v1579
        %v1620 = vunpack.c.l.b16 %v1580
        %v1621 = vunpack.c.l.b16 %v1581
        %v1622 = vunpack.c.h.b16 %v1580
        %v1623 = vunpack.c.h.b16 %v1581
        %v1624 = vunpack.c.l.b16 %v1582
        %v1625 = vunpack.c.l.b16 %v1583
        %v1626 = vunpack.c.h.b16 %v1582
        %v1627 = vunpack.c.h.b16 %v1583
        %v1628 = vunpack.c.l.b16 %v1584
        %v1629 = vunpack.c.l.b16 %v1585
        %v1630 = vunpack.c.h.b16 %v1584
        %v1631 = vunpack.c.h.b16 %v1585
        %v1632 = vunpack.c.l.b16 %v1586
        %v1633 = vunpack.c.l.b16 %v1587
        %v1634 = vunpack.c.h.b16 %v1586
        %v1635 = vunpack.c.h.b16 %v1587
        %v1636 = vpack.c.b16 %v1605, %v1604
        %v1637 = vpack.c.b16 %v1607, %v1606
        %v1638 = vpack.c.b16 %v1609, %v1608
        %v1639 = vpack.c.b16 %v1611, %v1610
        %v1640 = vpack.c.b16 %v1613, %v1612
        %v1641 = vpack.c.b16 %v1615, %v1614
        %v1642 = vpack.c.b16 %v1617, %v1616
        %v1643 = vpack.c.b16 %v1619, %v1618
        %v1644 = vpack.c.b16 %v1621, %v1620
        %v1645 = vpack.c.b16 %v1623, %v1622
        %v1646 = vpack.c.b16 %v1625, %v1624
        %v1647 = vpack.c.b16 %v1627, %v1626
        %v1648 = vpack.c.b16 %v1629, %v1628
        %v1649 = vpack.c.b16 %v1631, %v1630
        %v1650 = vpack.c.b16 %v1633, %v1632
        %v1651 = vpack.c.b16 %v1635, %v1634
        %1668 = vst [vmem:[%s467] sm:$0xff] %v1636
        %1669 = vst [vmem:[%s467 + $0x8] sm:$0xff] %v1637
        %1670 = vst [vmem:[%s467 + $0x10] sm:$0xff] %v1638
        %1671 = vst [vmem:[%s467 + $0x18] sm:$0xff] %v1639
        %1672 = vst [vmem:[%s467 + $0x20] sm:$0xff] %v1640
        %1673 = vst [vmem:[%s467 + $0x28] sm:$0xff] %v1641
        %1674 = vst [vmem:[%s467 + $0x30] sm:$0xff] %v1642
        %1675 = vst [vmem:[%s467 + $0x38] sm:$0xff] %v1643
        %1676 = vst [vmem:[%s467 + $0x40] sm:$0xff] %v1644
        %1677 = vst [vmem:[%s467 + $0x48] sm:$0xff] %v1645
        %1678 = vst [vmem:[%s467 + $0x50] sm:$0xff] %v1646
        %1679 = vst [vmem:[%s467 + $0x58] sm:$0xff] %v1647
        %1680 = vst [vmem:[%s467 + $0x60] sm:$0xff] %v1648
        %1681 = vst [vmem:[%s467 + $0x68] sm:$0xff] %v1649
        %1682 = vst [vmem:[%s467 + $0x70] sm:$0xff] %v1650
        %1683 = vst [vmem:[%s467 + $0x78] sm:$0xff] %v1651
        %s1684 = sand.u32 %s236, 1
        %s1685 = scalar_lea.sflag [#allocation4], %s1684
        %s1686 = sand.u32 %s236, 1
        %s1687 = smul.addr %s1686, 128
        %s1688 = scalar_lea.vmem [#allocation11], %s1687
        %s1689 = sand.u32 %s34, 1
        %s1690 = scalar_lea.sflag [#allocation13], %s1689
        %s1691 = sand.u32 %s262, 1
        %s1692 = smul.addr %s1691, 64
        %s1693 = scalar_lea.vmem [#allocation12], %s1692
        %s1694 = sand.u32 %s34, 1
        %s1695 = scalar_lea.sflag [#allocation13], %s1694
        %s1696 = sand.u32 %s288, 1
        %s1697 = smul.addr %s1696, 64
        %s1698 = scalar_lea.vmem [#allocation14], %s1697
        // Predicated region
        $region77: #{tpu_custom_call.1} parent=55 // pred_check
          %p1699 = pneg %p246
        $region78: #{tpu_custom_call.1} parent=55 // pred_check_branch
          %1701 = sbr.rel (%p1699) target = $region80
        $region79: #{tpu_custom_call.1} parent=55 // pred_region
          %s1702 = smul.u32 16, %s34
          %s1704 = ssub.s32 2048, 2048
          %1705 = vsyncadd %s1685, %s1704
          %s1706 = smul.addr %s1702, 2
          %s1707 = smul.addr %s1706, 64
          %s1708 = scalar_lea.hbm %s9, %s1707
          %s1709 = sshll.u32 %s1688, 4
          %s1710 = int_to_ptr.vmem [resolvable:$true] %s1709
          %1715 = dma.vmem_to_hbm [thread:$0]  %s1710, 2048, %s1708, %s1685, 128, 128, 8
        $region80: #{tpu_custom_call.1} parent=55 // pred_fallthru
          _
        // Predicated region
        $region81: #{tpu_custom_call.1} parent=55 // pred_check
          %p1716 = pneg %p272
        $region82: #{tpu_custom_call.1} parent=55 // pred_check_branch
          %1718 = sbr.rel (%p1716) target = $region84
        $region83: #{tpu_custom_call.1} parent=55 // pred_region
          %s1719 = smul.u32 16, %s34
          %s1721 = ssub.s32 1024, 1024
          %1722 = vsyncadd %s1690, %s1721
          %s1723 = smul.addr %s1719, 64
          %s1724 = scalar_lea.hbm %s10, %s1723
          %s1725 = sshll.u32 %s1693, 4
          %s1726 = int_to_ptr.vmem [resolvable:$true] %s1725
          %1731 = dma.vmem_to_hbm [thread:$0]  %s1726, 1024, %s1724, %s1690, 64, 64, 4
        $region84: #{tpu_custom_call.1} parent=55 // pred_fallthru
          _
        // Predicated region
        $region85: #{tpu_custom_call.1} parent=55 // pred_check
          %p1732 = pneg %p298
        $region86: #{tpu_custom_call.1} parent=55 // pred_check_branch
          %1734 = sbr.rel (%p1732) target = $region88
        $region87: #{tpu_custom_call.1} parent=55 // pred_region
          %s1735 = smul.u32 16, %s34
          %s1737 = ssub.s32 1024, 1024
          %1738 = vsyncadd %s1695, %s1737
          %s1739 = smul.addr %s1735, 64
          %s1740 = scalar_lea.hbm %s11, %s1739
          %s1741 = sshll.u32 %s1698, 4
          %s1742 = int_to_ptr.vmem [resolvable:$true] %s1741
          %1747 = dma.vmem_to_hbm [thread:$0]  %s1742, 1024, %s1740, %s1695, 64, 64, 4
        $region88: #{tpu_custom_call.1} parent=55 // pred_fallthru
          _
      $region56: #{tpu_custom_call.1} parent=5 // pred_fallthru
        _
      %p1748 = scmp.le.s32.totalorder 2, %s29
      // Predicated region
      $region89: #{tpu_custom_call.1} parent=5 // pred_check
        %p1749 = pneg %p1748
      $region90: #{tpu_custom_call.1} parent=5 // pred_check_branch
        %1751 = sbr.rel (%p1749) target = $region92
      $region91: #{tpu_custom_call.1} parent=5 // pred_region
        %s1752 = ssub.s32 %s29, 2
        // Predicated region
        $region93: #{tpu_custom_call.1} parent=91 // pred_check
          %p1753 = pneg %p252
        $region94: #{tpu_custom_call.1} parent=91 // pred_check_branch
          %1755 = sbr.rel (%p1753) target = $region96
        $region95: #{tpu_custom_call.1} parent=91 // pred_region
          %s1756 = sand.u32 %s237, 1
          %s1757 = scalar_lea.sflag [#allocation4], %s1756
          %s1758 = sand.u32 %s237, 1
          %s1759 = smul.addr %s1758, 128
          %s1760 = scalar_lea.vmem [#allocation11], %s1759
          %1761 = dma.done %s1757, 2048
        $region96: #{tpu_custom_call.1} parent=91 // pred_fallthru
          _
        // Predicated region
        $region97: #{tpu_custom_call.1} parent=91 // pred_check
          %p1762 = pneg %p278
        $region98: #{tpu_custom_call.1} parent=91 // pred_check_branch
          %1764 = sbr.rel (%p1762) target = $region100
        $region99: #{tpu_custom_call.1} parent=91 // pred_region
          %s1765 = sand.u32 %s35, 1
          %s1766 = scalar_lea.sflag [#allocation13], %s1765
          %s1767 = sand.u32 %s263, 1
          %s1768 = smul.addr %s1767, 64
          %s1769 = scalar_lea.vmem [#allocation12], %s1768
          %1770 = dma.done %s1766, 1024
        $region100: #{tpu_custom_call.1} parent=91 // pred_fallthru
          _
        // Predicated region
        $region101: #{tpu_custom_call.1} parent=91 // pred_check
          %p1771 = pneg %p304
        $region102: #{tpu_custom_call.1} parent=91 // pred_check_branch
          %1773 = sbr.rel (%p1771) target = $region104
        $region103: #{tpu_custom_call.1} parent=91 // pred_region
          %s1774 = sand.u32 %s35, 1
          %s1775 = scalar_lea.sflag [#allocation13], %s1774
          %s1776 = sand.u32 %s289, 1
          %s1777 = smul.addr %s1776, 64
          %s1778 = scalar_lea.vmem [#allocation14], %s1777
          %1779 = dma.done %s1775, 1024
        $region104: #{tpu_custom_call.1} parent=91 // pred_fallthru
          _
      $region92: #{tpu_custom_call.1} parent=5 // pred_fallthru
        _
    $region6: #{tpu_custom_call.1} parent=1 // loop_footer
      %s33 = sadd.s32 1, %s29
    $region7: #{tpu_custom_call.1} parent=1 // loop_footer_branch
      %28 = sbr.rel target = $region3
    $region8: #{tpu_custom_call.1} parent=1 // loop_exit
      _
    %1780 = vsyncpa [#allocation3], 1
    %s1781 = scalar_lea.sflag [#allocation3], 1
    %1782 = vsyncpa %s1781, 1
    %1783 = vsyncpa [#allocation6], 1
    %1784 = vsyncpa [#allocation9], 1
    %1785 = vsyncpa [#allocation4], 1
    %s1786 = scalar_lea.sflag [#allocation4], 1
    %1787 = vsyncpa %s1786, 1
    %1788 = vsyncpa [#allocation13], 1
    %s1789 = scalar_lea.sflag [#allocation13], 1
    %1790 = vsyncpa %s1789, 1

</llo_original>
